<compile_context>
chip_gen: v7x
topology: tpu7x:2x2x1
jax: 0.10.0
libtpu: 0.0.40
codegen_flags: <defaults>
</compile_context>

<pallas_src>
import functools

import jax
import jax.numpy as jnp
from jax.experimental import pallas as pl
from jax.experimental.pallas import tpu as pltpu

ENCODER_FEATURES = 1792   # encoder_params['saia_efficientnet-b4']['features']
FEATURE_DIM = 128
NUM_CLASSES = 1


def _head_kernel(fm_ref, wf_ref, bf_ref, wc_ref, bc_ref, out_ref, acc_ref,
                 *, inv_hw, total_hw, hw_tile, mask_hw):
    """Global-avg-pool (tiled over spatial) + Linear(C->F) + Linear(F->1).

    fm_ref : (TB, HW_TILE, C)  featuremap tile, channels-last (lane-dense C)
    wf_ref : (C, F)   feature.weight^T (pre-transposed once at init)
    bf_ref : (1, F)   feature.bias
    wc_ref : (1, F)   fc.weight row
    bc_ref : (1, 1)   fc.bias
    out_ref: (TB, 1)
    acc_ref: (TB, C)  f32 spatial-sum accumulator (persists over the hw axis)
    """
    hw_i = pl.program_id(1)

    @pl.when(hw_i == 0)
    def _():
        acc_ref[...] = jnp.zeros_like(acc_ref)

    fm = fm_ref[...].astype(jnp.float32)                      # f32 accumulation
    if mask_hw:
        # Last spatial block may run past H*W (cdiv padding): zero the overhang.
        pos = jax.lax.broadcasted_iota(jnp.int32, (hw_tile, 1), 0)  # (HW_TILE,1)
        fm = jnp.where(pos + hw_i * hw_tile < total_hw, fm, 0.0)
    acc_ref[...] += jnp.sum(fm, axis=1)                       # (TB, C)

    @pl.when(hw_i == pl.num_programs(1) - 1)
    def _():
        pooled = acc_ref[...] * inv_hw                        # mean over FULL H*W
        # feature: Linear(1792 -> 128) on the MXU, lane-dense K.
        feat = jnp.dot(pooled, wf_ref[...].astype(jnp.float32),
                       preferred_element_type=jnp.float32)
        feat = feat + bf_ref[...].astype(jnp.float32)         # (TB, F)
        # fc: Linear(128 -> 1) as VPU multiply + lane reduction (an N=1 MXU
        # matmul would waste the systolic array).
        logits = jnp.sum(feat * wc_ref[...].astype(jnp.float32),
                         axis=-1, keepdims=True)
        logits = logits + bc_ref[...].astype(jnp.float32)     # (TB, 1)
        out_ref[...] = logits.astype(out_ref.dtype)


def prepare_head_params(w_feat, b_feat, w_fc, b_fc):
    """One-time parameter prep (at init, NOT per forward call).

    w_feat: (FEATURE_DIM, ENCODER_FEATURES) -> transposed once to (C, F)
    w_fc  : (NUM_CLASSES, FEATURE_DIM)      -> used as-is (row layout)
    """
    return (
        jnp.asarray(w_feat).T,                                  # (C, F)
        jnp.asarray(b_feat).reshape(1, FEATURE_DIM),            # (1, F)
        jnp.asarray(w_fc).reshape(NUM_CLASSES, FEATURE_DIM),    # (1, F)
        jnp.asarray(b_fc).reshape(1, NUM_CLASSES),              # (1, 1)
    )


def _per_generation_budgets():
    """(featuremap VMEM budget, vmem_limit_bytes) sized to the chip generation."""
    try:
        phys_vmem = pltpu.get_tpu_info().vmem_capacity_bytes
    except Exception:
        phys_vmem = 64 * 1024 * 1024                 # conservative (v7x-sized)
    if phys_vmem >= 100 * 1024 * 1024:               # v5e / v6e: 128 MiB VMEM
        return 48 * 1024 * 1024, 64 * 1024 * 1024
    return 16 * 1024 * 1024, 32 * 1024 * 1024        # v7x: 64 MiB physical VMEM


def _pick_tiles(batch, hw, channels, itemsize, fm_budget_bytes):
    """Pick (TB, HW_TILE) so featuremap VMEM stays within fm_budget_bytes.

    Per-element accounting: 2x itemsize for the double buffer plus a possible
    full-tile f32 temporary from the sub-f32 -> f32 cast before the spatial
    sum.  TB must be a multiple of 8 or == batch (output-block rule); HW_TILE
    must be a multiple of 8 or == hw ((8,128) block rule).
    """
    eff = 2 * itemsize + (4 if itemsize < 4 else 0)
    per_pos = channels * eff                         # bytes per (sample, pos)

    def fits(tb, hw_t):
        return tb * hw_t * per_pos <= fm_budget_bytes

    def legal_tb(tb):
        return batch if tb >= batch else min(batch, max(8, (tb // 8) * 8))

    # First choice: full-HW blocks, batch tiled.
    tb = legal_tb(fm_budget_bytes // max(1, hw * per_pos))
    if batch > 8:
        # Keep >= 2 batch tiles so v7x's two TensorCores both get work
        # (one extra, overlapped grid step on single-core v5e/v6e: harmless).
        half = -(-batch // 2)
        tb = min(tb, ((half + 7) // 8) * 8)
    hw_tile = hw

    if not fits(tb, hw_tile):
        # Even the smallest legal batch tile overflows with full-HW blocks
        # (large spatial maps): tile the spatial axis instead.  The floor of
        # (8 batch rows x 8 positions) is far below any budget for this head.
        tb = batch if batch <= 8 else 8
        hw_tile = fm_budget_bytes // max(1, tb * per_pos)
        hw_tile = min(hw, max(8, (hw_tile // 8) * 8))
    elif (pl.cdiv(batch, tb) == 1 and hw >= 16
          and batch * hw * per_pos > 4 * 1024 * 1024):
        # Everything fits one (large) block: split the spatial axis so the
        # next tile's DMA overlaps compute (>= 2 grid steps).
        hw_tile = max(8, ((hw // 2) // 8) * 8)

    return tb, hw_tile


def binary_classifier_head(featuremap_nhwc, w_feat_t, b_feat2d, w_fc2d, b_fc2d,
                           *, fm_budget_bytes=None, vmem_limit_bytes=None):
    """featuremap_nhwc: (B, H, W, C) channels-last encoder featuremap (any float
    dtype; bf16 recommended -- the head is HBM-bandwidth-bound).

    Returns (output, featuremap) -- the has_feature=True path of the module.
    """
    B, H, W, C = featuremap_nhwc.shape
    HW = H * W
    fm = featuremap_nhwc.reshape(B, HW, C)           # contiguous -> free reshape

    auto_budget, auto_limit = _per_generation_budgets()
    fm_budget_bytes = auto_budget if fm_budget_bytes is None else fm_budget_bytes
    vmem_limit_bytes = auto_limit if vmem_limit_bytes is None else vmem_limit_bytes

    TB, HW_TILE = _pick_tiles(B, HW, C, fm.dtype.itemsize, fm_budget_bytes)
    grid = (pl.cdiv(B, TB), pl.cdiv(HW, HW_TILE))
    const2d = lambda b, h: (0, 0)                    # weights stay VMEM-resident

    kernel = functools.partial(
        _head_kernel,
        inv_hw=1.0 / HW,                             # divisor is the FULL H*W
        total_hw=HW,
        hw_tile=HW_TILE,
        mask_hw=(HW % HW_TILE) != 0,
    )

    output = pl.pallas_call(
        kernel,
        out_shape=jax.ShapeDtypeStruct((B, NUM_CLASSES), jnp.float32),
        grid=grid,
        in_specs=[
            pl.BlockSpec((TB, HW_TILE, C), lambda b, h: (b, h, 0)),  # streamed
            pl.BlockSpec((C, FEATURE_DIM), const2d),
            pl.BlockSpec((1, FEATURE_DIM), const2d),
            pl.BlockSpec((NUM_CLASSES, FEATURE_DIM), const2d),
            pl.BlockSpec((1, NUM_CLASSES), const2d),
        ],
        out_specs=pl.BlockSpec((TB, NUM_CLASSES), lambda b, h: (b, 0)),
        scratch_shapes=[pltpu.VMEM((TB, C), jnp.float32)],
        compiler_params=pltpu.CompilerParams(
            dimension_semantics=("parallel", "arbitrary"),
            vmem_limit_bytes=vmem_limit_bytes,
        ),
    )(fm, w_feat_t, b_feat2d, w_fc2d, b_fc2d)

    return output, featuremap_nhwc


if __name__ == "__main__":
    key = jax.random.PRNGKey(0)
    k_fm, k_wf, k_bf, k_wc, k_bc, k_fm2 = jax.random.split(key, 6)

    # nn.Linear parameter shapes from __init__ (kept f32; prepared once at init).
    w_feat = jax.random.normal(k_wf, (FEATURE_DIM, ENCODER_FEATURES), jnp.float32) * 0.02
    b_feat = jax.random.normal(k_bf, (FEATURE_DIM,), jnp.float32) * 0.02
    w_fc = jax.random.normal(k_wc, (NUM_CLASSES, FEATURE_DIM), jnp.float32) * 0.02
    b_fc = jax.random.normal(k_bc, (NUM_CLASSES,), jnp.float32) * 0.02
    params = prepare_head_params(w_feat, b_feat, w_fc, b_fc)

    def reference(fm_nhwc):
        # Plain-JAX reference mirroring the PyTorch forward math.
        pooled = fm_nhwc.astype(jnp.float32).mean(axis=(1, 2))  # pool + flatten(1)
        feat = pooled @ w_feat.T + b_feat                        # self.feature
        return feat @ w_fc.T + b_fc                              # self.fc

    # --- main demo: small module-consistent shapes, bf16 featuremap ----------
    B, H, W, C = 2, 8, 8, ENCODER_FEATURES
    featuremap = jax.random.normal(k_fm, (B, H, W, C), jnp.float32).astype(jnp.bfloat16)

    output, fmap_out = binary_classifier_head(featuremap, *params)
    jax.block_until_ready((output, fmap_out))

    assert output.shape == (B, NUM_CLASSES)
    assert fmap_out.shape == (B, H, W, C) and fmap_out.dtype == featuremap.dtype
    ref = reference(featuremap)
    assert jnp.allclose(output, ref, atol=2e-3, rtol=2e-3), (
        float(jnp.max(jnp.abs(output - ref))))

    # --- second config: exercises spatial tiling + edge masking (HW=25) ------
    B2, H2, W2 = 4, 5, 5
    featuremap2 = jax.random.normal(k_fm2, (B2, H2, W2, C), jnp.float32).astype(jnp.bfloat16)
    output2, _ = binary_classifier_head(featuremap2, *params,
                                        fm_budget_bytes=512 * 1024)
    jax.block_until_ready(output2)
    ref2 = reference(featuremap2)
    assert jnp.allclose(output2, ref2, atol=2e-3, rtol=2e-3), (
        float(jnp.max(jnp.abs(output2 - ref2))))

    print("KERNEL_OK")
</pallas_src>

<mosaic_0001>
module attributes {stable_mosaic.version = 11 : i64} {
  func.func @_head_kernel(%arg0: i32, %arg1: i32, %arg2: memref<2x64x1792xbf16, #tpu.memory_space<vmem>>, %arg3: memref<1792x128xf32, #tpu.memory_space<vmem>>, %arg4: memref<1x128xf32, #tpu.memory_space<vmem>>, %arg5: memref<1x128xf32, #tpu.memory_space<vmem>>, %arg6: memref<1x1xf32, #tpu.memory_space<vmem>>, %arg7: memref<2x1xf32, #tpu.memory_space<vmem>>, %arg8: memref<2x1792xf32, #tpu.memory_space<vmem>>) attributes {dimension_semantics = [#tpu.dimension_semantics<parallel>, #tpu.dimension_semantics<arbitrary>], iteration_bounds = array<i64: 1, 1>, scalar_prefetch = 0 : i64, scratch_operands = 1 : i64, tpu.core_type = #tpu.core_type<tc>, window_params = [{transform_indices = @transform_0, window_bounds = array<i64: 2, 64, 1792>}, {pipeline_mode = #tpu.pipeline_mode<synchronous>, transform_indices = @transform_1, window_bounds = array<i64: 1792, 128>}, {pipeline_mode = #tpu.pipeline_mode<synchronous>, transform_indices = @transform_2, window_bounds = array<i64: 1, 128>}, {pipeline_mode = #tpu.pipeline_mode<synchronous>, transform_indices = @transform_3, window_bounds = array<i64: 1, 128>}, {pipeline_mode = #tpu.pipeline_mode<synchronous>, transform_indices = @transform_4, window_bounds = array<i64: 1, 1>}, {transform_indices = @transform_5, window_bounds = array<i64: 2, 1>}]} {
    %c0_i32 = arith.constant 0 : i32
    %0 = arith.cmpi eq, %arg1, %c0_i32 : i32
    %1 = arith.extui %0 : i1 to i32
    %c0_i32_0 = arith.constant 0 : i32
    %2 = arith.cmpi ne, %1, %c0_i32_0 : i32
    scf.if %2 {
      %cst_9 = arith.constant 0.000000e+00 : f32
      %12 = vector.broadcast %cst_9 : f32 to vector<2x1792xf32>
      %c0_10 = arith.constant 0 : index
      %c0_11 = arith.constant 0 : index
      %13 = vector.load %arg8[%c0_10, %c0_11] : memref<2x1792xf32, #tpu.memory_space<vmem>>, vector<2x1792xf32>
      tpu.vector_store %arg8[%c0_10, %c0_11], %12 {strides = array<i32>} : memref<2x1792xf32, #tpu.memory_space<vmem>>, vector<2x1792xf32>,
    } else {
    }
    %c0 = arith.constant 0 : index
    %c0_1 = arith.constant 0 : index
    %c0_2 = arith.constant 0 : index
    %3 = vector.load %arg2[%c0, %c0_1, %c0_2] : memref<2x64x1792xbf16, #tpu.memory_space<vmem>>, vector<2x64x1792xbf16>
    %4 = arith.extf %3 : vector<2x64x1792xbf16> to vector<2x64x1792xf32>
    %c0_3 = arith.constant 0 : index
    %c0_4 = arith.constant 0 : index
    %5 = vector.load %arg8[%c0_3, %c0_4] : memref<2x1792xf32, #tpu.memory_space<vmem>>, vector<2x1792xf32>
    %cst = arith.constant dense<0.000000e+00> : vector<2x1792xf32>
    %6 = vector.multi_reduction <add>, %4, %cst [1] : vector<2x64x1792xf32> to vector<2x1792xf32>
    %7 = arith.addf %5, %6 : vector<2x1792xf32>
    %c0_5 = arith.constant 0 : index
    %c0_6 = arith.constant 0 : index
    %8 = vector.load %arg8[%c0_5, %c0_6] : memref<2x1792xf32, #tpu.memory_space<vmem>>, vector<2x1792xf32>
    tpu.vector_store %arg8[%c0_5, %c0_6], %7 {strides = array<i32>} : memref<2x1792xf32, #tpu.memory_space<vmem>>, vector<2x1792xf32>,
    %c0_i32_7 = arith.constant 0 : i32
    %9 = arith.cmpi eq, %arg1, %c0_i32_7 : i32
    %10 = arith.extui %9 : i1 to i32
    %c0_i32_8 = arith.constant 0 : i32
    %11 = arith.cmpi ne, %10, %c0_i32_8 : i32
    scf.if %11 {
      %c0_9 = arith.constant 0 : index
      %c0_10 = arith.constant 0 : index
      %12 = vector.load %arg8[%c0_9, %c0_10] : memref<2x1792xf32, #tpu.memory_space<vmem>>, vector<2x1792xf32>
      %cst_11 = arith.constant 1.562500e-02 : f32
      %13 = vector.broadcast %cst_11 : f32 to vector<2x1792xf32>
      %14 = arith.mulf %12, %13 : vector<2x1792xf32>
      %c0_12 = arith.constant 0 : index
      %c0_13 = arith.constant 0 : index
      %15 = vector.load %arg3[%c0_12, %c0_13] : memref<1792x128xf32, #tpu.memory_space<vmem>>, vector<1792x128xf32>
      %cst_14 = arith.constant dense<0.000000e+00> : vector<2x128xf32>
      %16 = tpu.matmul %14, %15, %cst_14 {dimension_numbers = #tpu.dot_dimension_numbers<[1], [0], [0], [1], [0, 0, 1, 1], [], []>} : vector<2x1792xf32>, vector<1792x128xf32>, vector<2x128xf32> -> vector<2x128xf32>
      %c0_15 = arith.constant 0 : index
      %c0_16 = arith.constant 0 : index
      %17 = vector.load %arg4[%c0_15, %c0_16] : memref<1x128xf32, #tpu.memory_space<vmem>>, vector<1x128xf32>
      %18 = vector.broadcast %17 : vector<1x128xf32> to vector<2x128xf32>
      %19 = arith.addf %16, %18 : vector<2x128xf32>
      %c0_17 = arith.constant 0 : index
      %c0_18 = arith.constant 0 : index
      %20 = vector.load %arg5[%c0_17, %c0_18] : memref<1x128xf32, #tpu.memory_space<vmem>>, vector<1x128xf32>
      %21 = vector.broadcast %20 : vector<1x128xf32> to vector<2x128xf32>
      %22 = arith.mulf %19, %21 : vector<2x128xf32>
      %cst_19 = arith.constant dense<0.000000e+00> : vector<2xf32>
      %23 = vector.multi_reduction <add>, %22, %cst_19 [1] : vector<2x128xf32> to vector<2xf32>
      %24 = vector.shape_cast %23 : vector<2xf32> to vector<2x1xf32>
      %c0_20 = arith.constant 0 : index
      %c0_21 = arith.constant 0 : index
      %25 = vector.load %arg6[%c0_20, %c0_21] : memref<1x1xf32, #tpu.memory_space<vmem>>, vector<1x1xf32>
      %26 = vector.broadcast %25 : vector<1x1xf32> to vector<2x1xf32>
      %27 = arith.addf %24, %26 : vector<2x1xf32>
      %c0_22 = arith.constant 0 : index
      %c0_23 = arith.constant 0 : index
      %28 = vector.load %arg7[%c0_22, %c0_23] : memref<2x1xf32, #tpu.memory_space<vmem>>, vector<2x1xf32>
      tpu.vector_store %arg7[%c0_22, %c0_23], %27 {strides = array<i32>} : memref<2x1xf32, #tpu.memory_space<vmem>>, vector<2x1xf32>,
    } else {
    }
    return
  }
  func.func @transform_0(%arg0: i32, %arg1: i32) -> (i32, i32, i32) {
    %c0_i32 = arith.constant 0 : i32
    %c0_i32_0 = arith.constant 0 : i32
    return %arg0, %arg1, %c0_i32 : i32, i32, i32
  }
  func.func @transform_1(%arg0: i32, %arg1: i32) -> (i32, i32) {
    %c0_i32 = arith.constant 0 : i32
    %c0_i32_0 = arith.constant 0 : i32
    %c0_i32_1 = arith.constant 0 : i32
    return %c0_i32, %c0_i32_0 : i32, i32
  }
  func.func @transform_2(%arg0: i32, %arg1: i32) -> (i32, i32) {
    %c0_i32 = arith.constant 0 : i32
    %c0_i32_0 = arith.constant 0 : i32
    %c0_i32_1 = arith.constant 0 : i32
    return %c0_i32, %c0_i32_0 : i32, i32
  }
  func.func @transform_3(%arg0: i32, %arg1: i32) -> (i32, i32) {
    %c0_i32 = arith.constant 0 : i32
    %c0_i32_0 = arith.constant 0 : i32
    %c0_i32_1 = arith.constant 0 : i32
    return %c0_i32, %c0_i32_0 : i32, i32
  }
  func.func @transform_4(%arg0: i32, %arg1: i32) -> (i32, i32) {
    %c0_i32 = arith.constant 0 : i32
    %c0_i32_0 = arith.constant 0 : i32
    %c0_i32_1 = arith.constant 0 : i32
    return %c0_i32, %c0_i32_0 : i32, i32
  }
  func.func @transform_5(%arg0: i32, %arg1: i32) -> (i32, i32) {
    %c0_i32 = arith.constant 0 : i32
    %c0_i32_0 = arith.constant 0 : i32
    return %arg0, %c0_i32 : i32, i32
  }
}

</mosaic_0001>

<llo_original>
// kernel: tpu_custom_call.1
$region0: #{tpu_custom_call.1}
  #allocation0 [shape = 'u32[]', space=smem, size = 0x4, offset = 0x4, fixed_abs, tag = 'smem constant byte address 0x4 - core index']
  #allocation1 [shape = 'u32[144,128]{1,0:T(1,128)}', space=vmem, size = 0x12000, scoped, tag = 'internal scratch']
  #allocation2 [shape = 'f32[2,1792]{1,0:T(2,128)}', space=vmem, size = 0x3800, scoped, tag = 'scratch operand']
  #allocation3 [shape = 'f32[1,1]{1,0:T(1,128)S(1)}', space=vmem, size = 0x200, scoped, tag = 'scoped memory for tpu_custom_call.1']
  %s0 = inlined_call_operand.hbm [shape: bf16[2,64,1792], index: 0, kind: input, shape index: {}]
  %s1 = inlined_call_operand.hbm [shape: f32[1792,128], index: 1, kind: input, shape index: {}]
  %s2 = inlined_call_operand.vmem [shape: f32[1,128], index: 2, kind: input, shape index: {}]
  %s3 = inlined_call_operand.vmem [shape: f32[1,128], index: 3, kind: input, shape index: {}]
  %s4 = inlined_call_operand.<no memory space> [shape: f32[1,1], index: 4, kind: input, shape index: {}]
  %s5 = inlined_call_operand.vmem [shape: f32[2,1], index: 5, kind: output, shape index: {}]
  %s6 = sld [smem:[#allocation0]]
  $region46: #{tpu_custom_call.1} parent=0
    _
  %s8 = ssub.s32 1, %s6
  %s9 = scalar_select 0, %s8, %s6
  %v10 = vstv %s4
  %11 = vst [vmem:[#allocation3] sm:$0x1] %v10
  $region1: #{tpu_custom_call.1} parent=0
    #allocation4 [shape = 'u8[458752]{0}', space=vmem, size = 0x70000, scoped, tag = 'input window, operand 0, single buffered']
    #allocation5 [shape = 's32[1]{0}', space=sflag, size = 0x4, scoped, tag = 'scoped memory for tpu_custom_call.1']
    #allocation6 [shape = 'u8[917504]{0}', space=vmem, size = 0xe0000, scoped, tag = 'input window, operand 1, single buffered']
    #allocation7 [shape = 's32[1]{0}', space=sflag, size = 0x4, scoped, tag = 'scoped memory for tpu_custom_call.1']
    %12 = vsyncpa [#allocation5], 0
    %13 = vsyncpa [#allocation7], 0
    // Predicated region
    $region2: #{tpu_custom_call.1} parent=1 // pred_check
      _
    $region3: #{tpu_custom_call.1} parent=1 // pred_check_branch
      %15 = sbr.rel (0) target = $region5
    $region4: #{tpu_custom_call.1} parent=1 // pred_region
      %s17 = ssub.s32 14336, 14336
      %18 = vsyncadd [#allocation5], %s17
      %s19 = sshll.u32 [#allocation4], 4
      %s20 = int_to_ptr.vmem [resolvable:$true] %s19
      %25 = dma.hbm_to_vmem [thread:$0]  %s0, 14336, %s20, [#allocation5], 896, 896, 56
    $region5: #{tpu_custom_call.1} parent=1 // pred_fallthru
      _
    // Predicated region
    $region6: #{tpu_custom_call.1} parent=1 // pred_check
      _
    $region7: #{tpu_custom_call.1} parent=1 // pred_check_branch
      %27 = sbr.rel (0) target = $region9
    $region8: #{tpu_custom_call.1} parent=1 // pred_region
      %s29 = ssub.s32 28672, 28672
      %30 = vsyncadd [#allocation7], %s29
      %s31 = sshll.u32 [#allocation6], 4
      %s32 = int_to_ptr.vmem [resolvable:$true] %s31
      %37 = dma.hbm_to_vmem [thread:$0]  %s1, 28672, %s32, [#allocation7], 128, 128, 8
    $region9: #{tpu_custom_call.1} parent=1 // pred_fallthru
      _
    // Predicated region
    $region10: #{tpu_custom_call.1} parent=1 // pred_check
      _
    $region11: #{tpu_custom_call.1} parent=1 // pred_check_branch
      %39 = sbr.rel (0) target = $region13
    $region12: #{tpu_custom_call.1} parent=1 // pred_region
      _
    $region13: #{tpu_custom_call.1} parent=1 // pred_fallthru
      _
    // Predicated region
    $region14: #{tpu_custom_call.1} parent=1 // pred_check
      _
    $region15: #{tpu_custom_call.1} parent=1 // pred_check_branch
      %41 = sbr.rel (0) target = $region17
    $region16: #{tpu_custom_call.1} parent=1 // pred_region
      _
    $region17: #{tpu_custom_call.1} parent=1 // pred_fallthru
      _
    // Predicated region
    $region18: #{tpu_custom_call.1} parent=1 // pred_check
      _
    $region19: #{tpu_custom_call.1} parent=1 // pred_check_branch
      %43 = sbr.rel (0) target = $region21
    $region20: #{tpu_custom_call.1} parent=1 // pred_region
      _
    $region21: #{tpu_custom_call.1} parent=1 // pred_fallthru
      _
    // Predicated region
    $region22: #{tpu_custom_call.1} parent=1 // pred_check
      _
    $region23: #{tpu_custom_call.1} parent=1 // pred_check_branch
      %45 = sbr.rel (0) target = $region25
    $region24: #{tpu_custom_call.1} parent=1 // pred_region
      %46 = dma.done [#allocation5], 14336
    $region25: #{tpu_custom_call.1} parent=1 // pred_fallthru
      _
    // Predicated region
    $region26: #{tpu_custom_call.1} parent=1 // pred_check
      _
    $region27: #{tpu_custom_call.1} parent=1 // pred_check_branch
      %48 = sbr.rel (0) target = $region29
    $region28: #{tpu_custom_call.1} parent=1 // pred_region
      %49 = dma.done [#allocation7], 28672
    $region29: #{tpu_custom_call.1} parent=1 // pred_fallthru
      _
    %p50 = scmp.eq.s32.totalorder 0, 0
    // Predicated region
    $region30: #{tpu_custom_call.1} parent=1 // pred_check
      %p51 = pneg %p50
    $region31: #{tpu_custom_call.1} parent=1 // pred_check_branch
      %53 = sbr.rel (%p51) target = $region33
    $region32: #{tpu_custom_call.1} parent=1 // pred_region
      %54 = vst [vmem:[#allocation2] sm:$0xff] 0.0
      %55 = vst [vmem:[#allocation2 + $0x8] sm:$0xff] 0.0
      %56 = vst [vmem:[#allocation2 + $0x10] sm:$0xff] 0.0
      %57 = vst [vmem:[#allocation2 + $0x18] sm:$0xf] 0.0
    $region33: #{tpu_custom_call.1} parent=1 // pred_fallthru
      _
    %v58 = vld [vmem:[#allocation4] sm:$0xff]
    %v59 = vld [vmem:[#allocation4 + $0x8] sm:$0xff]
    %v60 = vld [vmem:[#allocation4 + $0x10] sm:$0xff]
    %v61 = vld [vmem:[#allocation4 + $0x18] sm:$0xff]
    %v62 = vld [vmem:[#allocation4 + $0x20] sm:$0xff]
    %v63 = vld [vmem:[#allocation4 + $0x28] sm:$0xff]
    %v64 = vld [vmem:[#allocation4 + $0x30] sm:$0xff]
    %v65 = vld [vmem:[#allocation4 + $0x38] sm:$0xff]
    %v66 = vld [vmem:[#allocation4 + $0x40] sm:$0xff]
    %v67 = vld [vmem:[#allocation4 + $0x48] sm:$0xff]
    %v68 = vld [vmem:[#allocation4 + $0x50] sm:$0xff]
    %v69 = vld [vmem:[#allocation4 + $0x58] sm:$0xff]
    %v70 = vld [vmem:[#allocation4 + $0x60] sm:$0xff]
    %v71 = vld [vmem:[#allocation4 + $0x68] sm:$0xff]
    %v72 = vld [vmem:[#allocation4 + $0x70] sm:$0xff]
    %v73 = vld [vmem:[#allocation4 + $0x78] sm:$0xff]
    %v74 = vld [vmem:[#allocation4 + $0x80] sm:$0xff]
    %v75 = vld [vmem:[#allocation4 + $0x88] sm:$0xff]
    %v76 = vld [vmem:[#allocation4 + $0x90] sm:$0xff]
    %v77 = vld [vmem:[#allocation4 + $0x98] sm:$0xff]
    %v78 = vld [vmem:[#allocation4 + $0xa0] sm:$0xff]
    %v79 = vld [vmem:[#allocation4 + $0xa8] sm:$0xff]
    %v80 = vld [vmem:[#allocation4 + $0xb0] sm:$0xff]
    %v81 = vld [vmem:[#allocation4 + $0xb8] sm:$0xff]
    %v82 = vld [vmem:[#allocation4 + $0xc0] sm:$0xff]
    %v83 = vld [vmem:[#allocation4 + $0xc8] sm:$0xff]
    %v84 = vld [vmem:[#allocation4 + $0xd0] sm:$0xff]
    %v85 = vld [vmem:[#allocation4 + $0xd8] sm:$0xff]
    %v86 = vld [vmem:[#allocation4 + $0xe0] sm:$0xff]
    %v87 = vld [vmem:[#allocation4 + $0xe8] sm:$0xff]
    %v88 = vld [vmem:[#allocation4 + $0xf0] sm:$0xff]
    %v89 = vld [vmem:[#allocation4 + $0xf8] sm:$0xff]
    %v90 = vld [vmem:[#allocation4 + $0x100] sm:$0xff]
    %v91 = vld [vmem:[#allocation4 + $0x108] sm:$0xff]
    %v92 = vld [vmem:[#allocation4 + $0x110] sm:$0xff]
    %v93 = vld [vmem:[#allocation4 + $0x118] sm:$0xff]
    %v94 = vld [vmem:[#allocation4 + $0x120] sm:$0xff]
    %v95 = vld [vmem:[#allocation4 + $0x128] sm:$0xff]
    %v96 = vld [vmem:[#allocation4 + $0x130] sm:$0xff]
    %v97 = vld [vmem:[#allocation4 + $0x138] sm:$0xff]
    %v98 = vld [vmem:[#allocation4 + $0x140] sm:$0xff]
    %v99 = vld [vmem:[#allocation4 + $0x148] sm:$0xff]
    %v100 = vld [vmem:[#allocation4 + $0x150] sm:$0xff]
    %v101 = vld [vmem:[#allocation4 + $0x158] sm:$0xff]
    %v102 = vld [vmem:[#allocation4 + $0x160] sm:$0xff]
    %v103 = vld [vmem:[#allocation4 + $0x168] sm:$0xff]
    %v104 = vld [vmem:[#allocation4 + $0x170] sm:$0xff]
    %v105 = vld [vmem:[#allocation4 + $0x178] sm:$0xff]
    %v106 = vld [vmem:[#allocation4 + $0x180] sm:$0xff]
    %v107 = vld [vmem:[#allocation4 + $0x188] sm:$0xff]
    %v108 = vld [vmem:[#allocation4 + $0x190] sm:$0xff]
    %v109 = vld [vmem:[#allocation4 + $0x198] sm:$0xff]
    %v110 = vld [vmem:[#allocation4 + $0x1a0] sm:$0xff]
    %v111 = vld [vmem:[#allocation4 + $0x1a8] sm:$0xff]
    %v112 = vld [vmem:[#allocation4 + $0x1b0] sm:$0xff]
    %v113 = vld [vmem:[#allocation4 + $0x1b8] sm:$0xff]
    %v114 = vld [vmem:[#allocation4 + $0x1c0] sm:$0xff]
    %v115 = vld [vmem:[#allocation4 + $0x1c8] sm:$0xff]
    %v116 = vld [vmem:[#allocation4 + $0x1d0] sm:$0xff]
    %v117 = vld [vmem:[#allocation4 + $0x1d8] sm:$0xff]
    %v118 = vld [vmem:[#allocation4 + $0x1e0] sm:$0xff]
    %v119 = vld [vmem:[#allocation4 + $0x1e8] sm:$0xff]
    %v120 = vld [vmem:[#allocation4 + $0x1f0] sm:$0xff]
    %v121 = vld [vmem:[#allocation4 + $0x1f8] sm:$0xff]
    %v122 = vld [vmem:[#allocation4 + $0x200] sm:$0xff]
    %v123 = vld [vmem:[#allocation4 + $0x208] sm:$0xff]
    %v124 = vld [vmem:[#allocation4 + $0x210] sm:$0xff]
    %v125 = vld [vmem:[#allocation4 + $0x218] sm:$0xff]
    %v126 = vld [vmem:[#allocation4 + $0x220] sm:$0xff]
    %v127 = vld [vmem:[#allocation4 + $0x228] sm:$0xff]
    %v128 = vld [vmem:[#allocation4 + $0x230] sm:$0xff]
    %v129 = vld [vmem:[#allocation4 + $0x238] sm:$0xff]
    %v130 = vld [vmem:[#allocation4 + $0x240] sm:$0xff]
    %v131 = vld [vmem:[#allocation4 + $0x248] sm:$0xff]
    %v132 = vld [vmem:[#allocation4 + $0x250] sm:$0xff]
    %v133 = vld [vmem:[#allocation4 + $0x258] sm:$0xff]
    %v134 = vld [vmem:[#allocation4 + $0x260] sm:$0xff]
    %v135 = vld [vmem:[#allocation4 + $0x268] sm:$0xff]
    %v136 = vld [vmem:[#allocation4 + $0x270] sm:$0xff]
    %v137 = vld [vmem:[#allocation4 + $0x278] sm:$0xff]
    %v138 = vld [vmem:[#allocation4 + $0x280] sm:$0xff]
    %v139 = vld [vmem:[#allocation4 + $0x288] sm:$0xff]
    %v140 = vld [vmem:[#allocation4 + $0x290] sm:$0xff]
    %v141 = vld [vmem:[#allocation4 + $0x298] sm:$0xff]
    %v142 = vld [vmem:[#allocation4 + $0x2a0] sm:$0xff]
    %v143 = vld [vmem:[#allocation4 + $0x2a8] sm:$0xff]
    %v144 = vld [vmem:[#allocation4 + $0x2b0] sm:$0xff]
    %v145 = vld [vmem:[#allocation4 + $0x2b8] sm:$0xff]
    %v146 = vld [vmem:[#allocation4 + $0x2c0] sm:$0xff]
    %v147 = vld [vmem:[#allocation4 + $0x2c8] sm:$0xff]
    %v148 = vld [vmem:[#allocation4 + $0x2d0] sm:$0xff]
    %v149 = vld [vmem:[#allocation4 + $0x2d8] sm:$0xff]
    %v150 = vld [vmem:[#allocation4 + $0x2e0] sm:$0xff]
    %v151 = vld [vmem:[#allocation4 + $0x2e8] sm:$0xff]
    %v152 = vld [vmem:[#allocation4 + $0x2f0] sm:$0xff]
    %v153 = vld [vmem:[#allocation4 + $0x2f8] sm:$0xff]
    %v154 = vld [vmem:[#allocation4 + $0x300] sm:$0xff]
    %v155 = vld [vmem:[#allocation4 + $0x308] sm:$0xff]
    %v156 = vld [vmem:[#allocation4 + $0x310] sm:$0xff]
    %v157 = vld [vmem:[#allocation4 + $0x318] sm:$0xff]
    %v158 = vld [vmem:[#allocation4 + $0x320] sm:$0xff]
    %v159 = vld [vmem:[#allocation4 + $0x328] sm:$0xff]
    %v160 = vld [vmem:[#allocation4 + $0x330] sm:$0xff]
    %v161 = vld [vmem:[#allocation4 + $0x338] sm:$0xff]
    %v162 = vld [vmem:[#allocation4 + $0x340] sm:$0xff]
    %v163 = vld [vmem:[#allocation4 + $0x348] sm:$0xff]
    %v164 = vld [vmem:[#allocation4 + $0x350] sm:$0xff]
    %v165 = vld [vmem:[#allocation4 + $0x358] sm:$0xff]
    %v166 = vld [vmem:[#allocation4 + $0x360] sm:$0xff]
    %v167 = vld [vmem:[#allocation4 + $0x368] sm:$0xff]
    %v168 = vld [vmem:[#allocation4 + $0x370] sm:$0xff]
    %v169 = vld [vmem:[#allocation4 + $0x378] sm:$0xff]
    %v170 = vunpack.c.l.bf16 %v58
    %v171 = vunpack.c.h.bf16 %v58
    %v172 = vunpack.c.l.bf16 %v59
    %v173 = vunpack.c.h.bf16 %v59
    %v174 = vunpack.c.l.bf16 %v60
    %v175 = vunpack.c.h.bf16 %v60
    %v176 = vunpack.c.l.bf16 %v61
    %v177 = vunpack.c.h.bf16 %v61
    %v178 = vunpack.c.l.bf16 %v62
    %v179 = vunpack.c.h.bf16 %v62
    %v180 = vunpack.c.l.bf16 %v63
    %v181 = vunpack.c.h.bf16 %v63
    %v182 = vunpack.c.l.bf16 %v64
    %v183 = vunpack.c.h.bf16 %v64
    %v184 = vunpack.c.l.bf16 %v65
    %v185 = vunpack.c.h.bf16 %v65
    %v186 = vunpack.c.l.bf16 %v66
    %v187 = vunpack.c.h.bf16 %v66
    %v188 = vunpack.c.l.bf16 %v67
    %v189 = vunpack.c.h.bf16 %v67
    %v190 = vunpack.c.l.bf16 %v68
    %v191 = vunpack.c.h.bf16 %v68
    %v192 = vunpack.c.l.bf16 %v69
    %v193 = vunpack.c.h.bf16 %v69
    %v194 = vunpack.c.l.bf16 %v70
    %v195 = vunpack.c.h.bf16 %v70
    %v196 = vunpack.c.l.bf16 %v71
    %v197 = vunpack.c.h.bf16 %v71
    %v198 = vunpack.c.l.bf16 %v72
    %v199 = vunpack.c.h.bf16 %v72
    %v200 = vunpack.c.l.bf16 %v73
    %v201 = vunpack.c.h.bf16 %v73
    %v202 = vunpack.c.l.bf16 %v74
    %v203 = vunpack.c.h.bf16 %v74
    %v204 = vunpack.c.l.bf16 %v75
    %v205 = vunpack.c.h.bf16 %v75
    %v206 = vunpack.c.l.bf16 %v76
    %v207 = vunpack.c.h.bf16 %v76
    %v208 = vunpack.c.l.bf16 %v77
    %v209 = vunpack.c.h.bf16 %v77
    %v210 = vunpack.c.l.bf16 %v78
    %v211 = vunpack.c.h.bf16 %v78
    %v212 = vunpack.c.l.bf16 %v79
    %v213 = vunpack.c.h.bf16 %v79
    %v214 = vunpack.c.l.bf16 %v80
    %v215 = vunpack.c.h.bf16 %v80
    %v216 = vunpack.c.l.bf16 %v81
    %v217 = vunpack.c.h.bf16 %v81
    %v218 = vunpack.c.l.bf16 %v82
    %v219 = vunpack.c.h.bf16 %v82
    %v220 = vunpack.c.l.bf16 %v83
    %v221 = vunpack.c.h.bf16 %v83
    %v222 = vunpack.c.l.bf16 %v84
    %v223 = vunpack.c.h.bf16 %v84
    %v224 = vunpack.c.l.bf16 %v85
    %v225 = vunpack.c.h.bf16 %v85
    %v226 = vunpack.c.l.bf16 %v86
    %v227 = vunpack.c.h.bf16 %v86
    %v228 = vunpack.c.l.bf16 %v87
    %v229 = vunpack.c.h.bf16 %v87
    %v230 = vunpack.c.l.bf16 %v88
    %v231 = vunpack.c.h.bf16 %v88
    %v232 = vunpack.c.l.bf16 %v89
    %v233 = vunpack.c.h.bf16 %v89
    %v234 = vunpack.c.l.bf16 %v90
    %v235 = vunpack.c.h.bf16 %v90
    %v236 = vunpack.c.l.bf16 %v91
    %v237 = vunpack.c.h.bf16 %v91
    %v238 = vunpack.c.l.bf16 %v92
    %v239 = vunpack.c.h.bf16 %v92
    %v240 = vunpack.c.l.bf16 %v93
    %v241 = vunpack.c.h.bf16 %v93
    %v242 = vunpack.c.l.bf16 %v94
    %v243 = vunpack.c.h.bf16 %v94
    %v244 = vunpack.c.l.bf16 %v95
    %v245 = vunpack.c.h.bf16 %v95
    %v246 = vunpack.c.l.bf16 %v96
    %v247 = vunpack.c.h.bf16 %v96
    %v248 = vunpack.c.l.bf16 %v97
    %v249 = vunpack.c.h.bf16 %v97
    %v250 = vunpack.c.l.bf16 %v98
    %v251 = vunpack.c.h.bf16 %v98
    %v252 = vunpack.c.l.bf16 %v99
    %v253 = vunpack.c.h.bf16 %v99
    %v254 = vunpack.c.l.bf16 %v100
    %v255 = vunpack.c.h.bf16 %v100
    %v256 = vunpack.c.l.bf16 %v101
    %v257 = vunpack.c.h.bf16 %v101
    %v258 = vunpack.c.l.bf16 %v102
    %v259 = vunpack.c.h.bf16 %v102
    %v260 = vunpack.c.l.bf16 %v103
    %v261 = vunpack.c.h.bf16 %v103
    %v262 = vunpack.c.l.bf16 %v104
    %v263 = vunpack.c.h.bf16 %v104
    %v264 = vunpack.c.l.bf16 %v105
    %v265 = vunpack.c.h.bf16 %v105
    %v266 = vunpack.c.l.bf16 %v106
    %v267 = vunpack.c.h.bf16 %v106
    %v268 = vunpack.c.l.bf16 %v107
    %v269 = vunpack.c.h.bf16 %v107
    %v270 = vunpack.c.l.bf16 %v108
    %v271 = vunpack.c.h.bf16 %v108
    %v272 = vunpack.c.l.bf16 %v109
    %v273 = vunpack.c.h.bf16 %v109
    %v274 = vunpack.c.l.bf16 %v110
    %v275 = vunpack.c.h.bf16 %v110
    %v276 = vunpack.c.l.bf16 %v111
    %v277 = vunpack.c.h.bf16 %v111
    %v278 = vunpack.c.l.bf16 %v112
    %v279 = vunpack.c.h.bf16 %v112
    %v280 = vunpack.c.l.bf16 %v113
    %v281 = vunpack.c.h.bf16 %v113
    %v282 = vunpack.c.l.bf16 %v114
    %v283 = vunpack.c.h.bf16 %v114
    %v284 = vunpack.c.l.bf16 %v115
    %v285 = vunpack.c.h.bf16 %v115
    %v286 = vunpack.c.l.bf16 %v116
    %v287 = vunpack.c.h.bf16 %v116
    %v288 = vunpack.c.l.bf16 %v117
    %v289 = vunpack.c.h.bf16 %v117
    %v290 = vunpack.c.l.bf16 %v118
    %v291 = vunpack.c.h.bf16 %v118
    %v292 = vunpack.c.l.bf16 %v119
    %v293 = vunpack.c.h.bf16 %v119
    %v294 = vunpack.c.l.bf16 %v120
    %v295 = vunpack.c.h.bf16 %v120
    %v296 = vunpack.c.l.bf16 %v121
    %v297 = vunpack.c.h.bf16 %v121
    %v298 = vunpack.c.l.bf16 %v122
    %v299 = vunpack.c.h.bf16 %v122
    %v300 = vunpack.c.l.bf16 %v123
    %v301 = vunpack.c.h.bf16 %v123
    %v302 = vunpack.c.l.bf16 %v124
    %v303 = vunpack.c.h.bf16 %v124
    %v304 = vunpack.c.l.bf16 %v125
    %v305 = vunpack.c.h.bf16 %v125
    %v306 = vunpack.c.l.bf16 %v126
    %v307 = vunpack.c.h.bf16 %v126
    %v308 = vunpack.c.l.bf16 %v127
    %v309 = vunpack.c.h.bf16 %v127
    %v310 = vunpack.c.l.bf16 %v128
    %v311 = vunpack.c.h.bf16 %v128
    %v312 = vunpack.c.l.bf16 %v129
    %v313 = vunpack.c.h.bf16 %v129
    %v314 = vunpack.c.l.bf16 %v130
    %v315 = vunpack.c.h.bf16 %v130
    %v316 = vunpack.c.l.bf16 %v131
    %v317 = vunpack.c.h.bf16 %v131
    %v318 = vunpack.c.l.bf16 %v132
    %v319 = vunpack.c.h.bf16 %v132
    %v320 = vunpack.c.l.bf16 %v133
    %v321 = vunpack.c.h.bf16 %v133
    %v322 = vunpack.c.l.bf16 %v134
    %v323 = vunpack.c.h.bf16 %v134
    %v324 = vunpack.c.l.bf16 %v135
    %v325 = vunpack.c.h.bf16 %v135
    %v326 = vunpack.c.l.bf16 %v136
    %v327 = vunpack.c.h.bf16 %v136
    %v328 = vunpack.c.l.bf16 %v137
    %v329 = vunpack.c.h.bf16 %v137
    %v330 = vunpack.c.l.bf16 %v138
    %v331 = vunpack.c.h.bf16 %v138
    %v332 = vunpack.c.l.bf16 %v139
    %v333 = vunpack.c.h.bf16 %v139
    %v334 = vunpack.c.l.bf16 %v140
    %v335 = vunpack.c.h.bf16 %v140
    %v336 = vunpack.c.l.bf16 %v141
    %v337 = vunpack.c.h.bf16 %v141
    %v338 = vunpack.c.l.bf16 %v142
    %v339 = vunpack.c.h.bf16 %v142
    %v340 = vunpack.c.l.bf16 %v143
    %v341 = vunpack.c.h.bf16 %v143
    %v342 = vunpack.c.l.bf16 %v144
    %v343 = vunpack.c.h.bf16 %v144
    %v344 = vunpack.c.l.bf16 %v145
    %v345 = vunpack.c.h.bf16 %v145
    %v346 = vunpack.c.l.bf16 %v146
    %v347 = vunpack.c.h.bf16 %v146
    %v348 = vunpack.c.l.bf16 %v147
    %v349 = vunpack.c.h.bf16 %v147
    %v350 = vunpack.c.l.bf16 %v148
    %v351 = vunpack.c.h.bf16 %v148
    %v352 = vunpack.c.l.bf16 %v149
    %v353 = vunpack.c.h.bf16 %v149
    %v354 = vunpack.c.l.bf16 %v150
    %v355 = vunpack.c.h.bf16 %v150
    %v356 = vunpack.c.l.bf16 %v151
    %v357 = vunpack.c.h.bf16 %v151
    %v358 = vunpack.c.l.bf16 %v152
    %v359 = vunpack.c.h.bf16 %v152
    %v360 = vunpack.c.l.bf16 %v153
    %v361 = vunpack.c.h.bf16 %v153
    %v362 = vunpack.c.l.bf16 %v154
    %v363 = vunpack.c.h.bf16 %v154
    %v364 = vunpack.c.l.bf16 %v155
    %v365 = vunpack.c.h.bf16 %v155
    %v366 = vunpack.c.l.bf16 %v156
    %v367 = vunpack.c.h.bf16 %v156
    %v368 = vunpack.c.l.bf16 %v157
    %v369 = vunpack.c.h.bf16 %v157
    %v370 = vunpack.c.l.bf16 %v158
    %v371 = vunpack.c.h.bf16 %v158
    %v372 = vunpack.c.l.bf16 %v159
    %v373 = vunpack.c.h.bf16 %v159
    %v374 = vunpack.c.l.bf16 %v160
    %v375 = vunpack.c.h.bf16 %v160
    %v376 = vunpack.c.l.bf16 %v161
    %v377 = vunpack.c.h.bf16 %v161
    %v378 = vunpack.c.l.bf16 %v162
    %v379 = vunpack.c.h.bf16 %v162
    %v380 = vunpack.c.l.bf16 %v163
    %v381 = vunpack.c.h.bf16 %v163
    %v382 = vunpack.c.l.bf16 %v164
    %v383 = vunpack.c.h.bf16 %v164
    %v384 = vunpack.c.l.bf16 %v165
    %v385 = vunpack.c.h.bf16 %v165
    %v386 = vunpack.c.l.bf16 %v166
    %v387 = vunpack.c.h.bf16 %v166
    %v388 = vunpack.c.l.bf16 %v167
    %v389 = vunpack.c.h.bf16 %v167
    %v390 = vunpack.c.l.bf16 %v168
    %v391 = vunpack.c.h.bf16 %v168
    %v392 = vunpack.c.l.bf16 %v169
    %v393 = vunpack.c.h.bf16 %v169
    %v394 = vld [vmem:[#allocation2] sm:$0xff]
    %v395 = vld [vmem:[#allocation2 + $0x8] sm:$0xff]
    %v396 = vld [vmem:[#allocation2 + $0x10] sm:$0xff]
    %v397 = vld [vmem:[#allocation2 + $0x18] sm:$0xf]
    %v398 = vadd.f32 %v170, %v184
    %v399 = vadd.f32 %v398, %v198
    %v400 = vadd.f32 %v399, %v212
    %v401 = vadd.f32 %v400, %v226
    %v402 = vadd.f32 %v401, %v240
    %v403 = vadd.f32 %v402, %v254
    %v404 = vadd.f32 %v403, %v268
    %v405 = vrot.slane %v404, 4
    %v406 = vadd.f32 %v404, %v405
    %v407 = vrot.slane %v406, 2
    %v408 = vadd.f32 %v406, %v407
    %v409 = vrot.slane %v408, 1
    %v410 = vadd.f32 %v408, %v409
    %v411 = vadd.f32 %v171, %v185
    %v412 = vadd.f32 %v411, %v199
    %v413 = vadd.f32 %v412, %v213
    %v414 = vadd.f32 %v413, %v227
    %v415 = vadd.f32 %v414, %v241
    %v416 = vadd.f32 %v415, %v255
    %v417 = vadd.f32 %v416, %v269
    %v418 = vrot.slane %v417, 4
    %v419 = vadd.f32 %v417, %v418
    %v420 = vrot.slane %v419, 2
    %v421 = vadd.f32 %v419, %v420
    %v422 = vrot.slane %v421, 1
    %v423 = vadd.f32 %v421, %v422
    %v424 = vadd.f32 %v172, %v186
    %v425 = vadd.f32 %v424, %v200
    %v426 = vadd.f32 %v425, %v214
    %v427 = vadd.f32 %v426, %v228
    %v428 = vadd.f32 %v427, %v242
    %v429 = vadd.f32 %v428, %v256
    %v430 = vadd.f32 %v429, %v270
    %v431 = vrot.slane %v430, 4
    %v432 = vadd.f32 %v430, %v431
    %v433 = vrot.slane %v432, 2
    %v434 = vadd.f32 %v432, %v433
    %v435 = vrot.slane %v434, 1
    %v436 = vadd.f32 %v434, %v435
    %v437 = vadd.f32 %v173, %v187
    %v438 = vadd.f32 %v437, %v201
    %v439 = vadd.f32 %v438, %v215
    %v440 = vadd.f32 %v439, %v229
    %v441 = vadd.f32 %v440, %v243
    %v442 = vadd.f32 %v441, %v257
    %v443 = vadd.f32 %v442, %v271
    %v444 = vrot.slane %v443, 4
    %v445 = vadd.f32 %v443, %v444
    %v446 = vrot.slane %v445, 2
    %v447 = vadd.f32 %v445, %v446
    %v448 = vrot.slane %v447, 1
    %v449 = vadd.f32 %v447, %v448
    %v450 = vadd.f32 %v174, %v188
    %v451 = vadd.f32 %v450, %v202
    %v452 = vadd.f32 %v451, %v216
    %v453 = vadd.f32 %v452, %v230
    %v454 = vadd.f32 %v453, %v244
    %v455 = vadd.f32 %v454, %v258
    %v456 = vadd.f32 %v455, %v272
    %v457 = vrot.slane %v456, 4
    %v458 = vadd.f32 %v456, %v457
    %v459 = vrot.slane %v458, 2
    %v460 = vadd.f32 %v458, %v459
    %v461 = vrot.slane %v460, 1
    %v462 = vadd.f32 %v460, %v461
    %v463 = vadd.f32 %v175, %v189
    %v464 = vadd.f32 %v463, %v203
    %v465 = vadd.f32 %v464, %v217
    %v466 = vadd.f32 %v465, %v231
    %v467 = vadd.f32 %v466, %v245
    %v468 = vadd.f32 %v467, %v259
    %v469 = vadd.f32 %v468, %v273
    %v470 = vrot.slane %v469, 4
    %v471 = vadd.f32 %v469, %v470
    %v472 = vrot.slane %v471, 2
    %v473 = vadd.f32 %v471, %v472
    %v474 = vrot.slane %v473, 1
    %v475 = vadd.f32 %v473, %v474
    %v476 = vadd.f32 %v176, %v190
    %v477 = vadd.f32 %v476, %v204
    %v478 = vadd.f32 %v477, %v218
    %v479 = vadd.f32 %v478, %v232
    %v480 = vadd.f32 %v479, %v246
    %v481 = vadd.f32 %v480, %v260
    %v482 = vadd.f32 %v481, %v274
    %v483 = vrot.slane %v482, 4
    %v484 = vadd.f32 %v482, %v483
    %v485 = vrot.slane %v484, 2
    %v486 = vadd.f32 %v484, %v485
    %v487 = vrot.slane %v486, 1
    %v488 = vadd.f32 %v486, %v487
    %v489 = vadd.f32 %v177, %v191
    %v490 = vadd.f32 %v489, %v205
    %v491 = vadd.f32 %v490, %v219
    %v492 = vadd.f32 %v491, %v233
    %v493 = vadd.f32 %v492, %v247
    %v494 = vadd.f32 %v493, %v261
    %v495 = vadd.f32 %v494, %v275
    %v496 = vrot.slane %v495, 4
    %v497 = vadd.f32 %v495, %v496
    %v498 = vrot.slane %v497, 2
    %v499 = vadd.f32 %v497, %v498
    %v500 = vrot.slane %v499, 1
    %v501 = vadd.f32 %v499, %v500
    %v502 = vadd.f32 %v178, %v192
    %v503 = vadd.f32 %v502, %v206
    %v504 = vadd.f32 %v503, %v220
    %v505 = vadd.f32 %v504, %v234
    %v506 = vadd.f32 %v505, %v248
    %v507 = vadd.f32 %v506, %v262
    %v508 = vadd.f32 %v507, %v276
    %v509 = vrot.slane %v508, 4
    %v510 = vadd.f32 %v508, %v509
    %v511 = vrot.slane %v510, 2
    %v512 = vadd.f32 %v510, %v511
    %v513 = vrot.slane %v512, 1
    %v514 = vadd.f32 %v512, %v513
    %v515 = vadd.f32 %v179, %v193
    %v516 = vadd.f32 %v515, %v207
    %v517 = vadd.f32 %v516, %v221
    %v518 = vadd.f32 %v517, %v235
    %v519 = vadd.f32 %v518, %v249
    %v520 = vadd.f32 %v519, %v263
    %v521 = vadd.f32 %v520, %v277
    %v522 = vrot.slane %v521, 4
    %v523 = vadd.f32 %v521, %v522
    %v524 = vrot.slane %v523, 2
    %v525 = vadd.f32 %v523, %v524
    %v526 = vrot.slane %v525, 1
    %v527 = vadd.f32 %v525, %v526
    %v528 = vadd.f32 %v180, %v194
    %v529 = vadd.f32 %v528, %v208
    %v530 = vadd.f32 %v529, %v222
    %v531 = vadd.f32 %v530, %v236
    %v532 = vadd.f32 %v531, %v250
    %v533 = vadd.f32 %v532, %v264
    %v534 = vadd.f32 %v533, %v278
    %v535 = vrot.slane %v534, 4
    %v536 = vadd.f32 %v534, %v535
    %v537 = vrot.slane %v536, 2
    %v538 = vadd.f32 %v536, %v537
    %v539 = vrot.slane %v538, 1
    %v540 = vadd.f32 %v538, %v539
    %v541 = vadd.f32 %v181, %v195
    %v542 = vadd.f32 %v541, %v209
    %v543 = vadd.f32 %v542, %v223
    %v544 = vadd.f32 %v543, %v237
    %v545 = vadd.f32 %v544, %v251
    %v546 = vadd.f32 %v545, %v265
    %v547 = vadd.f32 %v546, %v279
    %v548 = vrot.slane %v547, 4
    %v549 = vadd.f32 %v547, %v548
    %v550 = vrot.slane %v549, 2
    %v551 = vadd.f32 %v549, %v550
    %v552 = vrot.slane %v551, 1
    %v553 = vadd.f32 %v551, %v552
    %v554 = vadd.f32 %v182, %v196
    %v555 = vadd.f32 %v554, %v210
    %v556 = vadd.f32 %v555, %v224
    %v557 = vadd.f32 %v556, %v238
    %v558 = vadd.f32 %v557, %v252
    %v559 = vadd.f32 %v558, %v266
    %v560 = vadd.f32 %v559, %v280
    %v561 = vrot.slane %v560, 4
    %v562 = vadd.f32 %v560, %v561
    %v563 = vrot.slane %v562, 2
    %v564 = vadd.f32 %v562, %v563
    %v565 = vrot.slane %v564, 1
    %v566 = vadd.f32 %v564, %v565
    %v567 = vadd.f32 %v183, %v197
    %v568 = vadd.f32 %v567, %v211
    %v569 = vadd.f32 %v568, %v225
    %v570 = vadd.f32 %v569, %v239
    %v571 = vadd.f32 %v570, %v253
    %v572 = vadd.f32 %v571, %v267
    %v573 = vadd.f32 %v572, %v281
    %v574 = vrot.slane %v573, 4
    %v575 = vadd.f32 %v573, %v574
    %v576 = vrot.slane %v575, 2
    %v577 = vadd.f32 %v575, %v576
    %v578 = vrot.slane %v577, 1
    %v579 = vadd.f32 %v577, %v578
    %v580 = vadd.f32 %v282, %v296
    %v581 = vadd.f32 %v580, %v310
    %v582 = vadd.f32 %v581, %v324
    %v583 = vadd.f32 %v582, %v338
    %v584 = vadd.f32 %v583, %v352
    %v585 = vadd.f32 %v584, %v366
    %v586 = vadd.f32 %v585, %v380
    %v587 = vrot.slane %v586, 4
    %v588 = vadd.f32 %v586, %v587
    %v589 = vrot.slane %v588, 2
    %v590 = vadd.f32 %v588, %v589
    %v591 = vrot.slane %v590, 1
    %v592 = vadd.f32 %v590, %v591
    %v593 = vadd.f32 %v283, %v297
    %v594 = vadd.f32 %v593, %v311
    %v595 = vadd.f32 %v594, %v325
    %v596 = vadd.f32 %v595, %v339
    %v597 = vadd.f32 %v596, %v353
    %v598 = vadd.f32 %v597, %v367
    %v599 = vadd.f32 %v598, %v381
    %v600 = vrot.slane %v599, 4
    %v601 = vadd.f32 %v599, %v600
    %v602 = vrot.slane %v601, 2
    %v603 = vadd.f32 %v601, %v602
    %v604 = vrot.slane %v603, 1
    %v605 = vadd.f32 %v603, %v604
    %v606 = vadd.f32 %v284, %v298
    %v607 = vadd.f32 %v606, %v312
    %v608 = vadd.f32 %v607, %v326
    %v609 = vadd.f32 %v608, %v340
    %v610 = vadd.f32 %v609, %v354
    %v611 = vadd.f32 %v610, %v368
    %v612 = vadd.f32 %v611, %v382
    %v613 = vrot.slane %v612, 4
    %v614 = vadd.f32 %v612, %v613
    %v615 = vrot.slane %v614, 2
    %v616 = vadd.f32 %v614, %v615
    %v617 = vrot.slane %v616, 1
    %v618 = vadd.f32 %v616, %v617
    %v619 = vadd.f32 %v285, %v299
    %v620 = vadd.f32 %v619, %v313
    %v621 = vadd.f32 %v620, %v327
    %v622 = vadd.f32 %v621, %v341
    %v623 = vadd.f32 %v622, %v355
    %v624 = vadd.f32 %v623, %v369
    %v625 = vadd.f32 %v624, %v383
    %v626 = vrot.slane %v625, 4
    %v627 = vadd.f32 %v625, %v626
    %v628 = vrot.slane %v627, 2
    %v629 = vadd.f32 %v627, %v628
    %v630 = vrot.slane %v629, 1
    %v631 = vadd.f32 %v629, %v630
    %v632 = vadd.f32 %v286, %v300
    %v633 = vadd.f32 %v632, %v314
    %v634 = vadd.f32 %v633, %v328
    %v635 = vadd.f32 %v634, %v342
    %v636 = vadd.f32 %v635, %v356
    %v637 = vadd.f32 %v636, %v370
    %v638 = vadd.f32 %v637, %v384
    %v639 = vrot.slane %v638, 4
    %v640 = vadd.f32 %v638, %v639
    %v641 = vrot.slane %v640, 2
    %v642 = vadd.f32 %v640, %v641
    %v643 = vrot.slane %v642, 1
    %v644 = vadd.f32 %v642, %v643
    %v645 = vadd.f32 %v287, %v301
    %v646 = vadd.f32 %v645, %v315
    %v647 = vadd.f32 %v646, %v329
    %v648 = vadd.f32 %v647, %v343
    %v649 = vadd.f32 %v648, %v357
    %v650 = vadd.f32 %v649, %v371
    %v651 = vadd.f32 %v650, %v385
    %v652 = vrot.slane %v651, 4
    %v653 = vadd.f32 %v651, %v652
    %v654 = vrot.slane %v653, 2
    %v655 = vadd.f32 %v653, %v654
    %v656 = vrot.slane %v655, 1
    %v657 = vadd.f32 %v655, %v656
    %v658 = vadd.f32 %v288, %v302
    %v659 = vadd.f32 %v658, %v316
    %v660 = vadd.f32 %v659, %v330
    %v661 = vadd.f32 %v660, %v344
    %v662 = vadd.f32 %v661, %v358
    %v663 = vadd.f32 %v662, %v372
    %v664 = vadd.f32 %v663, %v386
    %v665 = vrot.slane %v664, 4
    %v666 = vadd.f32 %v664, %v665
    %v667 = vrot.slane %v666, 2
    %v668 = vadd.f32 %v666, %v667
    %v669 = vrot.slane %v668, 1
    %v670 = vadd.f32 %v668, %v669
    %v671 = vadd.f32 %v289, %v303
    %v672 = vadd.f32 %v671, %v317
    %v673 = vadd.f32 %v672, %v331
    %v674 = vadd.f32 %v673, %v345
    %v675 = vadd.f32 %v674, %v359
    %v676 = vadd.f32 %v675, %v373
    %v677 = vadd.f32 %v676, %v387
    %v678 = vrot.slane %v677, 4
    %v679 = vadd.f32 %v677, %v678
    %v680 = vrot.slane %v679, 2
    %v681 = vadd.f32 %v679, %v680
    %v682 = vrot.slane %v681, 1
    %v683 = vadd.f32 %v681, %v682
    %v684 = vadd.f32 %v290, %v304
    %v685 = vadd.f32 %v684, %v318
    %v686 = vadd.f32 %v685, %v332
    %v687 = vadd.f32 %v686, %v346
    %v688 = vadd.f32 %v687, %v360
    %v689 = vadd.f32 %v688, %v374
    %v690 = vadd.f32 %v689, %v388
    %v691 = vrot.slane %v690, 4
    %v692 = vadd.f32 %v690, %v691
    %v693 = vrot.slane %v692, 2
    %v694 = vadd.f32 %v692, %v693
    %v695 = vrot.slane %v694, 1
    %v696 = vadd.f32 %v694, %v695
    %v697 = vadd.f32 %v291, %v305
    %v698 = vadd.f32 %v697, %v319
    %v699 = vadd.f32 %v698, %v333
    %v700 = vadd.f32 %v699, %v347
    %v701 = vadd.f32 %v700, %v361
    %v702 = vadd.f32 %v701, %v375
    %v703 = vadd.f32 %v702, %v389
    %v704 = vrot.slane %v703, 4
    %v705 = vadd.f32 %v703, %v704
    %v706 = vrot.slane %v705, 2
    %v707 = vadd.f32 %v705, %v706
    %v708 = vrot.slane %v707, 1
    %v709 = vadd.f32 %v707, %v708
    %v710 = vadd.f32 %v292, %v306
    %v711 = vadd.f32 %v710, %v320
    %v712 = vadd.f32 %v711, %v334
    %v713 = vadd.f32 %v712, %v348
    %v714 = vadd.f32 %v713, %v362
    %v715 = vadd.f32 %v714, %v376
    %v716 = vadd.f32 %v715, %v390
    %v717 = vrot.slane %v716, 4
    %v718 = vadd.f32 %v716, %v717
    %v719 = vrot.slane %v718, 2
    %v720 = vadd.f32 %v718, %v719
    %v721 = vrot.slane %v720, 1
    %v722 = vadd.f32 %v720, %v721
    %v723 = vadd.f32 %v293, %v307
    %v724 = vadd.f32 %v723, %v321
    %v725 = vadd.f32 %v724, %v335
    %v726 = vadd.f32 %v725, %v349
    %v727 = vadd.f32 %v726, %v363
    %v728 = vadd.f32 %v727, %v377
    %v729 = vadd.f32 %v728, %v391
    %v730 = vrot.slane %v729, 4
    %v731 = vadd.f32 %v729, %v730
    %v732 = vrot.slane %v731, 2
    %v733 = vadd.f32 %v731, %v732
    %v734 = vrot.slane %v733, 1
    %v735 = vadd.f32 %v733, %v734
    %v736 = vadd.f32 %v294, %v308
    %v737 = vadd.f32 %v736, %v322
    %v738 = vadd.f32 %v737, %v336
    %v739 = vadd.f32 %v738, %v350
    %v740 = vadd.f32 %v739, %v364
    %v741 = vadd.f32 %v740, %v378
    %v742 = vadd.f32 %v741, %v392
    %v743 = vrot.slane %v742, 4
    %v744 = vadd.f32 %v742, %v743
    %v745 = vrot.slane %v744, 2
    %v746 = vadd.f32 %v744, %v745
    %v747 = vrot.slane %v746, 1
    %v748 = vadd.f32 %v746, %v747
    %v749 = vadd.f32 %v295, %v309
    %v750 = vadd.f32 %v749, %v323
    %v751 = vadd.f32 %v750, %v337
    %v752 = vadd.f32 %v751, %v351
    %v753 = vadd.f32 %v752, %v365
    %v754 = vadd.f32 %v753, %v379
    %v755 = vadd.f32 %v754, %v393
    %v756 = vrot.slane %v755, 4
    %v757 = vadd.f32 %v755, %v756
    %v758 = vrot.slane %v757, 2
    %v759 = vadd.f32 %v757, %v758
    %v760 = vrot.slane %v759, 1
    %v761 = vadd.f32 %v759, %v760
    %v790 = vcombine.low %v410, %v423
    %v791 = vcombine.low %v436, %v449
    %v793 = vunpack.c.l.s4 1983009808
    %v794 = vunpack.c.0.s8 %v793
    %v795 = vlaneseq
    %v796 = vshrl.u32 %v795, 7
    %v797 = vsub.s32 %v794, %v796
    %v798 = vrot.slane %v790, %v797
    %v800 = vunpack.c.l.s4 1983009808
    %v801 = vunpack.c.0.s8 %v800
    %v802 = vlaneseq
    %v803 = vshrl.u32 %v802, 7
    %v804 = vsub.s32 %v801, %v803
    %v805 = vrot.slane %v791, %v804
    %v806 = vcombine.low %v798, %v805
    %v807 = vcombine.low %v462, %v475
    %v808 = vcombine.low %v488, %v501
    %v810 = vunpack.c.l.s4 1983009808
    %v811 = vunpack.c.0.s8 %v810
    %v812 = vlaneseq
    %v813 = vshrl.u32 %v812, 7
    %v814 = vsub.s32 %v811, %v813
    %v815 = vrot.slane %v807, %v814
    %v817 = vunpack.c.l.s4 1983009808
    %v818 = vunpack.c.0.s8 %v817
    %v819 = vlaneseq
    %v820 = vshrl.u32 %v819, 7
    %v821 = vsub.s32 %v818, %v820
    %v822 = vrot.slane %v808, %v821
    %v823 = vcombine.low %v815, %v822
    %v824 = vcombine.low %v514, %v527
    %v825 = vcombine.low %v540, %v553
    %v827 = vunpack.c.l.s4 1983009808
    %v828 = vunpack.c.0.s8 %v827
    %v829 = vlaneseq
    %v830 = vshrl.u32 %v829, 7
    %v831 = vsub.s32 %v828, %v830
    %v832 = vrot.slane %v824, %v831
    %v834 = vunpack.c.l.s4 1983009808
    %v835 = vunpack.c.0.s8 %v834
    %v836 = vlaneseq
    %v837 = vshrl.u32 %v836, 7
    %v838 = vsub.s32 %v835, %v837
    %v839 = vrot.slane %v825, %v838
    %v840 = vcombine.low %v832, %v839
    %v841 = vcombine.low %v566, %v579
    %v843 = vunpack.c.l.s4 1983009808
    %v844 = vunpack.c.0.s8 %v843
    %v845 = vlaneseq
    %v846 = vshrl.u32 %v845, 7
    %v847 = vsub.s32 %v844, %v846
    %v848 = vrot.slane %v841, %v847
    %v849 = vcombine.low %v592, %v605
    %v850 = vcombine.low %v618, %v631
    %v852 = vunpack.c.l.s4 1983009808
    %v853 = vunpack.c.0.s8 %v852
    %v854 = vlaneseq
    %v855 = vshrl.u32 %v854, 7
    %v856 = vsub.s32 %v853, %v855
    %v857 = vrot.slane %v849, %v856
    %v859 = vunpack.c.l.s4 1983009808
    %v860 = vunpack.c.0.s8 %v859
    %v861 = vlaneseq
    %v862 = vshrl.u32 %v861, 7
    %v863 = vsub.s32 %v860, %v862
    %v864 = vrot.slane %v850, %v863
    %v865 = vcombine.low %v857, %v864
    %v866 = vcombine.low %v644, %v657
    %v867 = vcombine.low %v670, %v683
    %v869 = vunpack.c.l.s4 1983009808
    %v870 = vunpack.c.0.s8 %v869
    %v871 = vlaneseq
    %v872 = vshrl.u32 %v871, 7
    %v873 = vsub.s32 %v870, %v872
    %v874 = vrot.slane %v866, %v873
    %v876 = vunpack.c.l.s4 1983009808
    %v877 = vunpack.c.0.s8 %v876
    %v878 = vlaneseq
    %v879 = vshrl.u32 %v878, 7
    %v880 = vsub.s32 %v877, %v879
    %v881 = vrot.slane %v867, %v880
    %v882 = vcombine.low %v874, %v881
    %v883 = vcombine.low %v696, %v709
    %v884 = vcombine.low %v722, %v735
    %v886 = vunpack.c.l.s4 1983009808
    %v887 = vunpack.c.0.s8 %v886
    %v888 = vlaneseq
    %v889 = vshrl.u32 %v888, 7
    %v890 = vsub.s32 %v887, %v889
    %v891 = vrot.slane %v883, %v890
    %v893 = vunpack.c.l.s4 1983009808
    %v894 = vunpack.c.0.s8 %v893
    %v895 = vlaneseq
    %v896 = vshrl.u32 %v895, 7
    %v897 = vsub.s32 %v894, %v896
    %v898 = vrot.slane %v884, %v897
    %v899 = vcombine.low %v891, %v898
    %v900 = vcombine.low %v748, %v761
    %v902 = vunpack.c.l.s4 1983009808
    %v903 = vunpack.c.0.s8 %v902
    %v904 = vlaneseq
    %v905 = vshrl.u32 %v904, 7
    %v906 = vsub.s32 %v903, %v905
    %v907 = vrot.slane %v900, %v906
    %vm908 = vcmask 1044484
    %v909 = vsel %vm908, %v806, %v806
    %vm910 = vcmask 1046534
    %v911 = vsel %vm910, %v806, %v909
    %v912 = vrot.slane %v865, 7
    %vm913 = vcmask 1041409
    %v914 = vsel %vm913, %v912, %v911
    %vm915 = vcmask 1043459
    %v916 = vsel %vm915, %v912, %v914
    %vm917 = vcmask 1045509
    %v918 = vsel %vm917, %v912, %v916
    %vm919 = vcmask 1047559
    %v920 = vsel %vm919, %v912, %v918
    %v921 = vsel %vm908, %v823, %v823
    %v922 = vsel %vm910, %v823, %v921
    %v923 = vrot.slane %v882, 7
    %v924 = vsel %vm913, %v923, %v922
    %v925 = vsel %vm915, %v923, %v924
    %v926 = vsel %vm917, %v923, %v925
    %v927 = vsel %vm919, %v923, %v926
    %v928 = vsel %vm908, %v840, %v840
    %v929 = vsel %vm910, %v840, %v928
    %v930 = vrot.slane %v899, 7
    %v931 = vsel %vm913, %v930, %v929
    %v932 = vsel %vm915, %v930, %v931
    %v933 = vsel %vm917, %v930, %v932
    %v934 = vsel %vm919, %v930, %v933
    %v935 = vsel %vm908, %v848, %v848
    %v936 = vsel %vm910, %v848, %v935
    %v937 = vrot.slane %v907, 7
    %v938 = vsel %vm913, %v937, %v936
    %v939 = vsel %vm915, %v937, %v938
    %v940 = vsel %vm917, %v937, %v939
    %v941 = vsel %vm919, %v937, %v940
    %v946 = vadd.f32 %v394, %v920
    %v947 = vadd.f32 %v395, %v927
    %v948 = vadd.f32 %v396, %v934
    %v949 = vadd.f32 %v397, %v941
    %950 = vst [vmem:[#allocation2] sm:$0xff] %v946
    %951 = vst [vmem:[#allocation2 + $0x8] sm:$0xff] %v947
    %952 = vst [vmem:[#allocation2 + $0x10] sm:$0xff] %v948
    %953 = vst [vmem:[#allocation2 + $0x18] sm:$0xf] %v949
    // Predicated region
    $region34: #{tpu_custom_call.1} parent=1 // pred_check
      %p954 = pneg %p50
    $region35: #{tpu_custom_call.1} parent=1 // pred_check_branch
      %956 = sbr.rel (%p954) target = $region37
    $region36: #{tpu_custom_call.1} parent=1 // pred_region
      %v957 = vld [vmem:[#allocation2] sm:$0xff]
      %v958 = vld [vmem:[#allocation2 + $0x8] sm:$0xff]
      %v959 = vld [vmem:[#allocation2 + $0x10] sm:$0xff]
      %v960 = vld [vmem:[#allocation2 + $0x18] sm:$0xf]
      %v961 = vmul.f32 %v957, 0.015625
      %v962 = vmul.f32 %v958, 0.015625
      %v963 = vmul.f32 %v959, 0.015625
      %v964 = vmul.f32 %v960, 0.015625
      %v965 = vld [vmem:[#allocation6] sm:$0xff]
      %v966 = vld [vmem:[#allocation6 + $0x8] sm:$0xff]
      %v967 = vld [vmem:[#allocation6 + $0x10] sm:$0xff]
      %v968 = vld [vmem:[#allocation6 + $0x18] sm:$0xff]
      %v969 = vld [vmem:[#allocation6 + $0x20] sm:$0xff]
      %v970 = vld [vmem:[#allocation6 + $0x28] sm:$0xff]
      %v971 = vld [vmem:[#allocation6 + $0x30] sm:$0xff]
      %v972 = vld [vmem:[#allocation6 + $0x38] sm:$0xff]
      %v973 = vld [vmem:[#allocation6 + $0x40] sm:$0xff]
      %v974 = vld [vmem:[#allocation6 + $0x48] sm:$0xff]
      %v975 = vld [vmem:[#allocation6 + $0x50] sm:$0xff]
      %v976 = vld [vmem:[#allocation6 + $0x58] sm:$0xff]
      %v977 = vld [vmem:[#allocation6 + $0x60] sm:$0xff]
      %v978 = vld [vmem:[#allocation6 + $0x68] sm:$0xff]
      %v979 = vld [vmem:[#allocation6 + $0x70] sm:$0xff]
      %v980 = vld [vmem:[#allocation6 + $0x78] sm:$0xff]
      %v981 = vld [vmem:[#allocation6 + $0x80] sm:$0xff]
      %v982 = vld [vmem:[#allocation6 + $0x88] sm:$0xff]
      %v983 = vld [vmem:[#allocation6 + $0x90] sm:$0xff]
      %v984 = vld [vmem:[#allocation6 + $0x98] sm:$0xff]
      %v985 = vld [vmem:[#allocation6 + $0xa0] sm:$0xff]
      %v986 = vld [vmem:[#allocation6 + $0xa8] sm:$0xff]
      %v987 = vld [vmem:[#allocation6 + $0xb0] sm:$0xff]
      %v988 = vld [vmem:[#allocation6 + $0xb8] sm:$0xff]
      %v989 = vld [vmem:[#allocation6 + $0xc0] sm:$0xff]
      %v990 = vld [vmem:[#allocation6 + $0xc8] sm:$0xff]
      %v991 = vld [vmem:[#allocation6 + $0xd0] sm:$0xff]
      %v992 = vld [vmem:[#allocation6 + $0xd8] sm:$0xff]
      %v993 = vld [vmem:[#allocation6 + $0xe0] sm:$0xff]
      %v994 = vld [vmem:[#allocation6 + $0xe8] sm:$0xff]
      %v995 = vld [vmem:[#allocation6 + $0xf0] sm:$0xff]
      %v996 = vld [vmem:[#allocation6 + $0xf8] sm:$0xff]
      %v997 = vld [vmem:[#allocation6 + $0x100] sm:$0xff]
      %v998 = vld [vmem:[#allocation6 + $0x108] sm:$0xff]
      %v999 = vld [vmem:[#allocation6 + $0x110] sm:$0xff]
      %v1000 = vld [vmem:[#allocation6 + $0x118] sm:$0xff]
      %v1001 = vld [vmem:[#allocation6 + $0x120] sm:$0xff]
      %v1002 = vld [vmem:[#allocation6 + $0x128] sm:$0xff]
      %v1003 = vld [vmem:[#allocation6 + $0x130] sm:$0xff]
      %v1004 = vld [vmem:[#allocation6 + $0x138] sm:$0xff]
      %v1005 = vld [vmem:[#allocation6 + $0x140] sm:$0xff]
      %v1006 = vld [vmem:[#allocation6 + $0x148] sm:$0xff]
      %v1007 = vld [vmem:[#allocation6 + $0x150] sm:$0xff]
      %v1008 = vld [vmem:[#allocation6 + $0x158] sm:$0xff]
      %v1009 = vld [vmem:[#allocation6 + $0x160] sm:$0xff]
      %v1010 = vld [vmem:[#allocation6 + $0x168] sm:$0xff]
      %v1011 = vld [vmem:[#allocation6 + $0x170] sm:$0xff]
      %v1012 = vld [vmem:[#allocation6 + $0x178] sm:$0xff]
      %v1013 = vld [vmem:[#allocation6 + $0x180] sm:$0xff]
      %v1014 = vld [vmem:[#allocation6 + $0x188] sm:$0xff]
      %v1015 = vld [vmem:[#allocation6 + $0x190] sm:$0xff]
      %v1016 = vld [vmem:[#allocation6 + $0x198] sm:$0xff]
      %v1017 = vld [vmem:[#allocation6 + $0x1a0] sm:$0xff]
      %v1018 = vld [vmem:[#allocation6 + $0x1a8] sm:$0xff]
      %v1019 = vld [vmem:[#allocation6 + $0x1b0] sm:$0xff]
      %v1020 = vld [vmem:[#allocation6 + $0x1b8] sm:$0xff]
      %v1021 = vld [vmem:[#allocation6 + $0x1c0] sm:$0xff]
      %v1022 = vld [vmem:[#allocation6 + $0x1c8] sm:$0xff]
      %v1023 = vld [vmem:[#allocation6 + $0x1d0] sm:$0xff]
      %v1024 = vld [vmem:[#allocation6 + $0x1d8] sm:$0xff]
      %v1025 = vld [vmem:[#allocation6 + $0x1e0] sm:$0xff]
      %v1026 = vld [vmem:[#allocation6 + $0x1e8] sm:$0xff]
      %v1027 = vld [vmem:[#allocation6 + $0x1f0] sm:$0xff]
      %v1028 = vld [vmem:[#allocation6 + $0x1f8] sm:$0xff]
      %v1029 = vld [vmem:[#allocation6 + $0x200] sm:$0xff]
      %v1030 = vld [vmem:[#allocation6 + $0x208] sm:$0xff]
      %v1031 = vld [vmem:[#allocation6 + $0x210] sm:$0xff]
      %v1032 = vld [vmem:[#allocation6 + $0x218] sm:$0xff]
      %v1033 = vld [vmem:[#allocation6 + $0x220] sm:$0xff]
      %v1034 = vld [vmem:[#allocation6 + $0x228] sm:$0xff]
      %v1035 = vld [vmem:[#allocation6 + $0x230] sm:$0xff]
      %v1036 = vld [vmem:[#allocation6 + $0x238] sm:$0xff]
      %v1037 = vld [vmem:[#allocation6 + $0x240] sm:$0xff]
      %v1038 = vld [vmem:[#allocation6 + $0x248] sm:$0xff]
      %v1039 = vld [vmem:[#allocation6 + $0x250] sm:$0xff]
      %v1040 = vld [vmem:[#allocation6 + $0x258] sm:$0xff]
      %v1041 = vld [vmem:[#allocation6 + $0x260] sm:$0xff]
      %v1042 = vld [vmem:[#allocation6 + $0x268] sm:$0xff]
      %v1043 = vld [vmem:[#allocation6 + $0x270] sm:$0xff]
      %v1044 = vld [vmem:[#allocation6 + $0x278] sm:$0xff]
      %v1045 = vld [vmem:[#allocation6 + $0x280] sm:$0xff]
      %v1046 = vld [vmem:[#allocation6 + $0x288] sm:$0xff]
      %v1047 = vld [vmem:[#allocation6 + $0x290] sm:$0xff]
      %v1048 = vld [vmem:[#allocation6 + $0x298] sm:$0xff]
      %v1049 = vld [vmem:[#allocation6 + $0x2a0] sm:$0xff]
      %v1050 = vld [vmem:[#allocation6 + $0x2a8] sm:$0xff]
      %v1051 = vld [vmem:[#allocation6 + $0x2b0] sm:$0xff]
      %v1052 = vld [vmem:[#allocation6 + $0x2b8] sm:$0xff]
      %v1053 = vld [vmem:[#allocation6 + $0x2c0] sm:$0xff]
      %v1054 = vld [vmem:[#allocation6 + $0x2c8] sm:$0xff]
      %v1055 = vld [vmem:[#allocation6 + $0x2d0] sm:$0xff]
      %v1056 = vld [vmem:[#allocation6 + $0x2d8] sm:$0xff]
      %v1057 = vld [vmem:[#allocation6 + $0x2e0] sm:$0xff]
      %v1058 = vld [vmem:[#allocation6 + $0x2e8] sm:$0xff]
      %v1059 = vld [vmem:[#allocation6 + $0x2f0] sm:$0xff]
      %v1060 = vld [vmem:[#allocation6 + $0x2f8] sm:$0xff]
      %v1061 = vld [vmem:[#allocation6 + $0x300] sm:$0xff]
      %v1062 = vld [vmem:[#allocation6 + $0x308] sm:$0xff]
      %v1063 = vld [vmem:[#allocation6 + $0x310] sm:$0xff]
      %v1064 = vld [vmem:[#allocation6 + $0x318] sm:$0xff]
      %v1065 = vld [vmem:[#allocation6 + $0x320] sm:$0xff]
      %v1066 = vld [vmem:[#allocation6 + $0x328] sm:$0xff]
      %v1067 = vld [vmem:[#allocation6 + $0x330] sm:$0xff]
      %v1068 = vld [vmem:[#allocation6 + $0x338] sm:$0xff]
      %v1069 = vld [vmem:[#allocation6 + $0x340] sm:$0xff]
      %v1070 = vld [vmem:[#allocation6 + $0x348] sm:$0xff]
      %v1071 = vld [vmem:[#allocation6 + $0x350] sm:$0xff]
      %v1072 = vld [vmem:[#allocation6 + $0x358] sm:$0xff]
      %v1073 = vld [vmem:[#allocation6 + $0x360] sm:$0xff]
      %v1074 = vld [vmem:[#allocation6 + $0x368] sm:$0xff]
      %v1075 = vld [vmem:[#allocation6 + $0x370] sm:$0xff]
      %v1076 = vld [vmem:[#allocation6 + $0x378] sm:$0xff]
      %v1077 = vld [vmem:[#allocation6 + $0x380] sm:$0xff]
      %v1078 = vld [vmem:[#allocation6 + $0x388] sm:$0xff]
      %v1079 = vld [vmem:[#allocation6 + $0x390] sm:$0xff]
      %v1080 = vld [vmem:[#allocation6 + $0x398] sm:$0xff]
      %v1081 = vld [vmem:[#allocation6 + $0x3a0] sm:$0xff]
      %v1082 = vld [vmem:[#allocation6 + $0x3a8] sm:$0xff]
      %v1083 = vld [vmem:[#allocation6 + $0x3b0] sm:$0xff]
      %v1084 = vld [vmem:[#allocation6 + $0x3b8] sm:$0xff]
      %v1085 = vld [vmem:[#allocation6 + $0x3c0] sm:$0xff]
      %v1086 = vld [vmem:[#allocation6 + $0x3c8] sm:$0xff]
      %v1087 = vld [vmem:[#allocation6 + $0x3d0] sm:$0xff]
      %v1088 = vld [vmem:[#allocation6 + $0x3d8] sm:$0xff]
      %v1089 = vld [vmem:[#allocation6 + $0x3e0] sm:$0xff]
      %v1090 = vld [vmem:[#allocation6 + $0x3e8] sm:$0xff]
      %v1091 = vld [vmem:[#allocation6 + $0x3f0] sm:$0xff]
      %v1092 = vld [vmem:[#allocation6 + $0x3f8] sm:$0xff]
      %v1093 = vld [vmem:[#allocation6 + $0x400] sm:$0xff]
      %v1094 = vld [vmem:[#allocation6 + $0x408] sm:$0xff]
      %v1095 = vld [vmem:[#allocation6 + $0x410] sm:$0xff]
      %v1096 = vld [vmem:[#allocation6 + $0x418] sm:$0xff]
      %v1097 = vld [vmem:[#allocation6 + $0x420] sm:$0xff]
      %v1098 = vld [vmem:[#allocation6 + $0x428] sm:$0xff]
      %v1099 = vld [vmem:[#allocation6 + $0x430] sm:$0xff]
      %v1100 = vld [vmem:[#allocation6 + $0x438] sm:$0xff]
      %v1101 = vld [vmem:[#allocation6 + $0x440] sm:$0xff]
      %v1102 = vld [vmem:[#allocation6 + $0x448] sm:$0xff]
      %v1103 = vld [vmem:[#allocation6 + $0x450] sm:$0xff]
      %v1104 = vld [vmem:[#allocation6 + $0x458] sm:$0xff]
      %v1105 = vld [vmem:[#allocation6 + $0x460] sm:$0xff]
      %v1106 = vld [vmem:[#allocation6 + $0x468] sm:$0xff]
      %v1107 = vld [vmem:[#allocation6 + $0x470] sm:$0xff]
      %v1108 = vld [vmem:[#allocation6 + $0x478] sm:$0xff]
      %v1109 = vld [vmem:[#allocation6 + $0x480] sm:$0xff]
      %v1110 = vld [vmem:[#allocation6 + $0x488] sm:$0xff]
      %v1111 = vld [vmem:[#allocation6 + $0x490] sm:$0xff]
      %v1112 = vld [vmem:[#allocation6 + $0x498] sm:$0xff]
      %v1113 = vld [vmem:[#allocation6 + $0x4a0] sm:$0xff]
      %v1114 = vld [vmem:[#allocation6 + $0x4a8] sm:$0xff]
      %v1115 = vld [vmem:[#allocation6 + $0x4b0] sm:$0xff]
      %v1116 = vld [vmem:[#allocation6 + $0x4b8] sm:$0xff]
      %v1117 = vld [vmem:[#allocation6 + $0x4c0] sm:$0xff]
      %v1118 = vld [vmem:[#allocation6 + $0x4c8] sm:$0xff]
      %v1119 = vld [vmem:[#allocation6 + $0x4d0] sm:$0xff]
      %v1120 = vld [vmem:[#allocation6 + $0x4d8] sm:$0xff]
      %v1121 = vld [vmem:[#allocation6 + $0x4e0] sm:$0xff]
      %v1122 = vld [vmem:[#allocation6 + $0x4e8] sm:$0xff]
      %v1123 = vld [vmem:[#allocation6 + $0x4f0] sm:$0xff]
      %v1124 = vld [vmem:[#allocation6 + $0x4f8] sm:$0xff]
      %v1125 = vld [vmem:[#allocation6 + $0x500] sm:$0xff]
      %v1126 = vld [vmem:[#allocation6 + $0x508] sm:$0xff]
      %v1127 = vld [vmem:[#allocation6 + $0x510] sm:$0xff]
      %v1128 = vld [vmem:[#allocation6 + $0x518] sm:$0xff]
      %v1129 = vld [vmem:[#allocation6 + $0x520] sm:$0xff]
      %v1130 = vld [vmem:[#allocation6 + $0x528] sm:$0xff]
      %v1131 = vld [vmem:[#allocation6 + $0x530] sm:$0xff]
      %v1132 = vld [vmem:[#allocation6 + $0x538] sm:$0xff]
      %v1133 = vld [vmem:[#allocation6 + $0x540] sm:$0xff]
      %v1134 = vld [vmem:[#allocation6 + $0x548] sm:$0xff]
      %v1135 = vld [vmem:[#allocation6 + $0x550] sm:$0xff]
      %v1136 = vld [vmem:[#allocation6 + $0x558] sm:$0xff]
      %v1137 = vld [vmem:[#allocation6 + $0x560] sm:$0xff]
      %v1138 = vld [vmem:[#allocation6 + $0x568] sm:$0xff]
      %v1139 = vld [vmem:[#allocation6 + $0x570] sm:$0xff]
      %v1140 = vld [vmem:[#allocation6 + $0x578] sm:$0xff]
      %v1141 = vld [vmem:[#allocation6 + $0x580] sm:$0xff]
      %v1142 = vld [vmem:[#allocation6 + $0x588] sm:$0xff]
      %v1143 = vld [vmem:[#allocation6 + $0x590] sm:$0xff]
      %v1144 = vld [vmem:[#allocation6 + $0x598] sm:$0xff]
      %v1145 = vld [vmem:[#allocation6 + $0x5a0] sm:$0xff]
      %v1146 = vld [vmem:[#allocation6 + $0x5a8] sm:$0xff]
      %v1147 = vld [vmem:[#allocation6 + $0x5b0] sm:$0xff]
      %v1148 = vld [vmem:[#allocation6 + $0x5b8] sm:$0xff]
      %v1149 = vld [vmem:[#allocation6 + $0x5c0] sm:$0xff]
      %v1150 = vld [vmem:[#allocation6 + $0x5c8] sm:$0xff]
      %v1151 = vld [vmem:[#allocation6 + $0x5d0] sm:$0xff]
      %v1152 = vld [vmem:[#allocation6 + $0x5d8] sm:$0xff]
      %v1153 = vld [vmem:[#allocation6 + $0x5e0] sm:$0xff]
      %v1154 = vld [vmem:[#allocation6 + $0x5e8] sm:$0xff]
      %v1155 = vld [vmem:[#allocation6 + $0x5f0] sm:$0xff]
      %v1156 = vld [vmem:[#allocation6 + $0x5f8] sm:$0xff]
      %v1157 = vld [vmem:[#allocation6 + $0x600] sm:$0xff]
      %v1158 = vld [vmem:[#allocation6 + $0x608] sm:$0xff]
      %v1159 = vld [vmem:[#allocation6 + $0x610] sm:$0xff]
      %v1160 = vld [vmem:[#allocation6 + $0x618] sm:$0xff]
      %v1161 = vld [vmem:[#allocation6 + $0x620] sm:$0xff]
      %v1162 = vld [vmem:[#allocation6 + $0x628] sm:$0xff]
      %v1163 = vld [vmem:[#allocation6 + $0x630] sm:$0xff]
      %v1164 = vld [vmem:[#allocation6 + $0x638] sm:$0xff]
      %v1165 = vld [vmem:[#allocation6 + $0x640] sm:$0xff]
      %v1166 = vld [vmem:[#allocation6 + $0x648] sm:$0xff]
      %v1167 = vld [vmem:[#allocation6 + $0x650] sm:$0xff]
      %v1168 = vld [vmem:[#allocation6 + $0x658] sm:$0xff]
      %v1169 = vld [vmem:[#allocation6 + $0x660] sm:$0xff]
      %v1170 = vld [vmem:[#allocation6 + $0x668] sm:$0xff]
      %v1171 = vld [vmem:[#allocation6 + $0x670] sm:$0xff]
      %v1172 = vld [vmem:[#allocation6 + $0x678] sm:$0xff]
      %v1173 = vld [vmem:[#allocation6 + $0x680] sm:$0xff]
      %v1174 = vld [vmem:[#allocation6 + $0x688] sm:$0xff]
      %v1175 = vld [vmem:[#allocation6 + $0x690] sm:$0xff]
      %v1176 = vld [vmem:[#allocation6 + $0x698] sm:$0xff]
      %v1177 = vld [vmem:[#allocation6 + $0x6a0] sm:$0xff]
      %v1178 = vld [vmem:[#allocation6 + $0x6a8] sm:$0xff]
      %v1179 = vld [vmem:[#allocation6 + $0x6b0] sm:$0xff]
      %v1180 = vld [vmem:[#allocation6 + $0x6b8] sm:$0xff]
      %v1181 = vld [vmem:[#allocation6 + $0x6c0] sm:$0xff]
      %v1182 = vld [vmem:[#allocation6 + $0x6c8] sm:$0xff]
      %v1183 = vld [vmem:[#allocation6 + $0x6d0] sm:$0xff]
      %v1184 = vld [vmem:[#allocation6 + $0x6d8] sm:$0xff]
      %v1185 = vld [vmem:[#allocation6 + $0x6e0] sm:$0xff]
      %v1186 = vld [vmem:[#allocation6 + $0x6e8] sm:$0xff]
      %v1187 = vld [vmem:[#allocation6 + $0x6f0] sm:$0xff]
      %v1188 = vld [vmem:[#allocation6 + $0x6f8] sm:$0xff]
      %v1189 = vld [vmem:[%s2] sm:$0x1]
      %v1191 = vlaneseq
      %v1192 = vshrl.u32 %v1191, 7
      %v1193 = vsub.s32 0, %v1192
      %v1194 = vrot.slane %v1189, %v1193
      %v1200 = vcombine.high %v961, %v961
      %v1202 = vunpack.c.l.s4 1983009808
      %v1203 = vunpack.c.0.s8 %v1202
      %v1204 = vlaneseq
      %v1205 = vshrl.u32 %v1204, 7
      %v1206 = vsub.s32 %v1203, %v1205
      %v1207 = vrot.slane %v961, %v1206
      %v1209 = vunpack.c.l.s4 1983009808
      %v1210 = vunpack.c.0.s8 %v1209
      %v1211 = vlaneseq
      %v1212 = vshrl.u32 %v1211, 7
      %v1213 = vsub.s32 %v1210, %v1212
      %v1214 = vrot.slane %v1200, %v1213
      %v1215 = vcombine.high %v1207, %v1207
      %v1216 = vcombine.high %v1214, %v1214
      %v1217 = vcombine.high %v962, %v962
      %v1219 = vunpack.c.l.s4 1983009808
      %v1220 = vunpack.c.0.s8 %v1219
      %v1221 = vlaneseq
      %v1222 = vshrl.u32 %v1221, 7
      %v1223 = vsub.s32 %v1220, %v1222
      %v1224 = vrot.slane %v962, %v1223
      %v1226 = vunpack.c.l.s4 1983009808
      %v1227 = vunpack.c.0.s8 %v1226
      %v1228 = vlaneseq
      %v1229 = vshrl.u32 %v1228, 7
      %v1230 = vsub.s32 %v1227, %v1229
      %v1231 = vrot.slane %v1217, %v1230
      %v1232 = vcombine.high %v1224, %v1224
      %v1233 = vcombine.high %v1231, %v1231
      %v1234 = vcombine.high %v963, %v963
      %v1236 = vunpack.c.l.s4 1983009808
      %v1237 = vunpack.c.0.s8 %v1236
      %v1238 = vlaneseq
      %v1239 = vshrl.u32 %v1238, 7
      %v1240 = vsub.s32 %v1237, %v1239
      %v1241 = vrot.slane %v963, %v1240
      %v1243 = vunpack.c.l.s4 1983009808
      %v1244 = vunpack.c.0.s8 %v1243
      %v1245 = vlaneseq
      %v1246 = vshrl.u32 %v1245, 7
      %v1247 = vsub.s32 %v1244, %v1246
      %v1248 = vrot.slane %v1234, %v1247
      %v1249 = vcombine.high %v1241, %v1241
      %v1250 = vcombine.high %v1248, %v1248
      %v1252 = vunpack.c.l.s4 1983009808
      %v1253 = vunpack.c.0.s8 %v1252
      %v1254 = vlaneseq
      %v1255 = vshrl.u32 %v1254, 7
      %v1256 = vsub.s32 %v1253, %v1255
      %v1257 = vrot.slane %v964, %v1256
      %v1258 = vcombine.high %v1257, %v1257
      %1273 = vmatprep.subr.mxu0 0.0
      %1274 = vmatpush1.msra.mxu0 %v965
      %1275 = vmatprep.subr.mxu0 0.0
      %1276 = vmatpush1.msra.mxu0 %v966
      %1277 = vmatprep.subr.mxu0 0.0
      %1278 = vmatpush1.msra.mxu0 %v967
      %1279 = vmatprep.subr.mxu0 0.0
      %1280 = vmatpush1.msra.mxu0 %v968
      %1281 = vmatprep.subr.mxu0 0.0
      %1282 = vmatpush1.msra.mxu0 %v969
      %1283 = vmatprep.subr.mxu0 0.0
      %1284 = vmatpush1.msra.mxu0 %v970
      %1285 = vmatprep.subr.mxu0 0.0
      %1286 = vmatpush1.msra.mxu0 %v971
      %1287 = vmatprep.subr.mxu0 0.0
      %1288 = vmatpush1.msra.mxu0 %v972
      %1289 = vmatprep.subr.mxu0 0.0
      %1290 = vmatpush1.msra.mxu0 %v973
      %1291 = vmatprep.subr.mxu0 0.0
      %1292 = vmatpush1.msra.mxu0 %v974
      %1293 = vmatprep.subr.mxu0 0.0
      %1294 = vmatpush1.msra.mxu0 %v975
      %1295 = vmatprep.subr.mxu0 0.0
      %1296 = vmatpush1.msra.mxu0 %v976
      %1297 = vmatprep.subr.mxu0 0.0
      %1298 = vmatpush1.msra.mxu0 %v977
      %1299 = vmatprep.subr.mxu0 0.0
      %1300 = vmatpush1.msra.mxu0 %v978
      %1301 = vmatprep.subr.mxu0 0.0
      %1302 = vmatpush1.msra.mxu0 %v979
      %1303 = vmatprep.subr.mxu0 0.0
      %1304 = vmatpush1.msra.mxu0 %v980
      %1305 = vmatprep.subr.mxu0 0.0
      %1306 = vmatpush1.msra.mxu0 %v981
      %1307 = vmatprep.subr.mxu0 0.0
      %1308 = vmatpush1.msra.mxu0 %v982
      %1309 = vmatprep.subr.mxu0 0.0
      %1310 = vmatpush1.msra.mxu0 %v983
      %1311 = vmatprep.subr.mxu0 0.0
      %1312 = vmatpush1.msra.mxu0 %v984
      %1313 = vmatprep.subr.mxu0 0.0
      %1314 = vmatpush1.msra.mxu0 %v985
      %1315 = vmatprep.subr.mxu0 0.0
      %1316 = vmatpush1.msra.mxu0 %v986
      %1317 = vmatprep.subr.mxu0 0.0
      %1318 = vmatpush1.msra.mxu0 %v987
      %1319 = vmatprep.subr.mxu0 0.0
      %1320 = vmatpush1.msra.mxu0 %v988
      %1321 = vmatprep.subr.mxu0 0.0
      %1322 = vmatpush1.msra.mxu0 %v989
      %1323 = vmatprep.subr.mxu0 0.0
      %1324 = vmatpush1.msra.mxu0 %v990
      %1325 = vmatprep.subr.mxu0 0.0
      %1326 = vmatpush1.msra.mxu0 %v991
      %1327 = vmatprep.subr.mxu0 0.0
      %1328 = vmatpush1.msra.mxu0 %v992
      %1329 = vmatprep.subr.mxu0 0.0
      %1330 = vmatpush1.msra.mxu0 %v993
      %1331 = vmatprep.subr.mxu0 0.0
      %1332 = vmatpush1.msra.mxu0 %v994
      %1333 = vmatprep.subr.mxu0 0.0
      %1334 = vmatpush1.msra.mxu0 %v995
      %1335 = vmatprep.subr.mxu0 0.0
      %1336 = vmatpush1.msra.mxu0 %v996
      %1337 = vmatprep.mubr.f32.mxu0 %v1215
      %1338 = vmatmul.mubr.f32.gmra.mrb[0].mxu0 %v1207
      %v1339 = vpop.f32.mrb[0].mxu0
      %v1340 = vadd.f32 %v1194, %v1339
      %v1341 = vpop.f32.mrb[0].mxu0
      %1342 = vdwg.mxu0
      %1343 = vmatprep.subr.mxu0 0.0
      %1344 = vmatpush1.msra.mxu0 %v997
      %1345 = vmatprep.subr.mxu0 0.0
      %1346 = vmatpush1.msra.mxu0 %v998
      %1347 = vmatprep.subr.mxu0 0.0
      %1348 = vmatpush1.msra.mxu0 %v999
      %1349 = vmatprep.subr.mxu0 0.0
      %1350 = vmatpush1.msra.mxu0 %v1000
      %1351 = vmatprep.subr.mxu0 0.0
      %1352 = vmatpush1.msra.mxu0 %v1001
      %1353 = vmatprep.subr.mxu0 0.0
      %1354 = vmatpush1.msra.mxu0 %v1002
      %1355 = vmatprep.subr.mxu0 0.0
      %1356 = vmatpush1.msra.mxu0 %v1003
      %1357 = vmatprep.subr.mxu0 0.0
      %1358 = vmatpush1.msra.mxu0 %v1004
      %1359 = vmatprep.subr.mxu0 0.0
      %1360 = vmatpush1.msra.mxu0 %v1005
      %1361 = vmatprep.subr.mxu0 0.0
      %1362 = vmatpush1.msra.mxu0 %v1006
      %1363 = vmatprep.subr.mxu0 0.0
      %1364 = vmatpush1.msra.mxu0 %v1007
      %1365 = vmatprep.subr.mxu0 0.0
      %1366 = vmatpush1.msra.mxu0 %v1008
      %1367 = vmatprep.subr.mxu0 0.0
      %1368 = vmatpush1.msra.mxu0 %v1009
      %1369 = vmatprep.subr.mxu0 0.0
      %1370 = vmatpush1.msra.mxu0 %v1010
      %1371 = vmatprep.subr.mxu0 0.0
      %1372 = vmatpush1.msra.mxu0 %v1011
      %1373 = vmatprep.subr.mxu0 0.0
      %1374 = vmatpush1.msra.mxu0 %v1012
      %1375 = vmatprep.subr.mxu0 0.0
      %1376 = vmatpush1.msra.mxu0 %v1013
      %1377 = vmatprep.subr.mxu0 0.0
      %1378 = vmatpush1.msra.mxu0 %v1014
      %1379 = vmatprep.subr.mxu0 0.0
      %1380 = vmatpush1.msra.mxu0 %v1015
      %1381 = vmatprep.subr.mxu0 0.0
      %1382 = vmatpush1.msra.mxu0 %v1016
      %1383 = vmatprep.subr.mxu0 0.0
      %1384 = vmatpush1.msra.mxu0 %v1017
      %1385 = vmatprep.subr.mxu0 0.0
      %1386 = vmatpush1.msra.mxu0 %v1018
      %1387 = vmatprep.subr.mxu0 0.0
      %1388 = vmatpush1.msra.mxu0 %v1019
      %1389 = vmatprep.subr.mxu0 0.0
      %1390 = vmatpush1.msra.mxu0 %v1020
      %1391 = vmatprep.subr.mxu0 0.0
      %1392 = vmatpush1.msra.mxu0 %v1021
      %1393 = vmatprep.subr.mxu0 0.0
      %1394 = vmatpush1.msra.mxu0 %v1022
      %1395 = vmatprep.subr.mxu0 0.0
      %1396 = vmatpush1.msra.mxu0 %v1023
      %1397 = vmatprep.subr.mxu0 0.0
      %1398 = vmatpush1.msra.mxu0 %v1024
      %1399 = vmatprep.subr.mxu0 0.0
      %1400 = vmatpush1.msra.mxu0 %v1025
      %1401 = vmatprep.subr.mxu0 0.0
      %1402 = vmatpush1.msra.mxu0 %v1026
      %1403 = vmatprep.subr.mxu0 0.0
      %1404 = vmatpush1.msra.mxu0 %v1027
      %1405 = vmatprep.subr.mxu0 0.0
      %1406 = vmatpush1.msra.mxu0 %v1028
      %1407 = vmatprep.mubr.f32.mxu0 %v1216
      %1408 = vmatmul.mubr.f32.gmra.mrb[0].mxu0 %v1214
      %v1409 = vpop.f32.mrb[0].mxu0
      %v1410 = vadd.f32 %v1340, %v1409
      %v1411 = vpop.f32.mrb[0].mxu0
      %1412 = vdwg.mxu0
      %1413 = vmatprep.subr.mxu0 0.0
      %1414 = vmatpush1.msra.mxu0 %v1029
      %1415 = vmatprep.subr.mxu0 0.0
      %1416 = vmatpush1.msra.mxu0 %v1030
      %1417 = vmatprep.subr.mxu0 0.0
      %1418 = vmatpush1.msra.mxu0 %v1031
      %1419 = vmatprep.subr.mxu0 0.0
      %1420 = vmatpush1.msra.mxu0 %v1032
      %1421 = vmatprep.subr.mxu0 0.0
      %1422 = vmatpush1.msra.mxu0 %v1033
      %1423 = vmatprep.subr.mxu0 0.0
      %1424 = vmatpush1.msra.mxu0 %v1034
      %1425 = vmatprep.subr.mxu0 0.0
      %1426 = vmatpush1.msra.mxu0 %v1035
      %1427 = vmatprep.subr.mxu0 0.0
      %1428 = vmatpush1.msra.mxu0 %v1036
      %1429 = vmatprep.subr.mxu0 0.0
      %1430 = vmatpush1.msra.mxu0 %v1037
      %1431 = vmatprep.subr.mxu0 0.0
      %1432 = vmatpush1.msra.mxu0 %v1038
      %1433 = vmatprep.subr.mxu0 0.0
      %1434 = vmatpush1.msra.mxu0 %v1039
      %1435 = vmatprep.subr.mxu0 0.0
      %1436 = vmatpush1.msra.mxu0 %v1040
      %1437 = vmatprep.subr.mxu0 0.0
      %1438 = vmatpush1.msra.mxu0 %v1041
      %1439 = vmatprep.subr.mxu0 0.0
      %1440 = vmatpush1.msra.mxu0 %v1042
      %1441 = vmatprep.subr.mxu0 0.0
      %1442 = vmatpush1.msra.mxu0 %v1043
      %1443 = vmatprep.subr.mxu0 0.0
      %1444 = vmatpush1.msra.mxu0 %v1044
      %1445 = vmatprep.subr.mxu0 0.0
      %1446 = vmatpush1.msra.mxu0 %v1045
      %1447 = vmatprep.subr.mxu0 0.0
      %1448 = vmatpush1.msra.mxu0 %v1046
      %1449 = vmatprep.subr.mxu0 0.0
      %1450 = vmatpush1.msra.mxu0 %v1047
      %1451 = vmatprep.subr.mxu0 0.0
      %1452 = vmatpush1.msra.mxu0 %v1048
      %1453 = vmatprep.subr.mxu0 0.0
      %1454 = vmatpush1.msra.mxu0 %v1049
      %1455 = vmatprep.subr.mxu0 0.0
      %1456 = vmatpush1.msra.mxu0 %v1050
      %1457 = vmatprep.subr.mxu0 0.0
      %1458 = vmatpush1.msra.mxu0 %v1051
      %1459 = vmatprep.subr.mxu0 0.0
      %1460 = vmatpush1.msra.mxu0 %v1052
      %1461 = vmatprep.subr.mxu0 0.0
      %1462 = vmatpush1.msra.mxu0 %v1053
      %1463 = vmatprep.subr.mxu0 0.0
      %1464 = vmatpush1.msra.mxu0 %v1054
      %1465 = vmatprep.subr.mxu0 0.0
      %1466 = vmatpush1.msra.mxu0 %v1055
      %1467 = vmatprep.subr.mxu0 0.0
      %1468 = vmatpush1.msra.mxu0 %v1056
      %1469 = vmatprep.subr.mxu0 0.0
      %1470 = vmatpush1.msra.mxu0 %v1057
      %1471 = vmatprep.subr.mxu0 0.0
      %1472 = vmatpush1.msra.mxu0 %v1058
      %1473 = vmatprep.subr.mxu0 0.0
      %1474 = vmatpush1.msra.mxu0 %v1059
      %1475 = vmatprep.subr.mxu0 0.0
      %1476 = vmatpush1.msra.mxu0 %v1060
      %1477 = vmatprep.mubr.f32.mxu0 %v1232
      %1478 = vmatmul.mubr.f32.gmra.mrb[0].mxu0 %v1224
      %v1479 = vpop.f32.mrb[0].mxu0
      %v1480 = vadd.f32 %v1410, %v1479
      %v1481 = vpop.f32.mrb[0].mxu0
      %1482 = vdwg.mxu0
      %1483 = vmatprep.subr.mxu0 0.0
      %1484 = vmatpush1.msra.mxu0 %v1061
      %1485 = vmatprep.subr.mxu0 0.0
      %1486 = vmatpush1.msra.mxu0 %v1062
      %1487 = vmatprep.subr.mxu0 0.0
      %1488 = vmatpush1.msra.mxu0 %v1063
      %1489 = vmatprep.subr.mxu0 0.0
      %1490 = vmatpush1.msra.mxu0 %v1064
      %1491 = vmatprep.subr.mxu0 0.0
      %1492 = vmatpush1.msra.mxu0 %v1065
      %1493 = vmatprep.subr.mxu0 0.0
      %1494 = vmatpush1.msra.mxu0 %v1066
      %1495 = vmatprep.subr.mxu0 0.0
      %1496 = vmatpush1.msra.mxu0 %v1067
      %1497 = vmatprep.subr.mxu0 0.0
      %1498 = vmatpush1.msra.mxu0 %v1068
      %1499 = vmatprep.subr.mxu0 0.0
      %1500 = vmatpush1.msra.mxu0 %v1069
      %1501 = vmatprep.subr.mxu0 0.0
      %1502 = vmatpush1.msra.mxu0 %v1070
      %1503 = vmatprep.subr.mxu0 0.0
      %1504 = vmatpush1.msra.mxu0 %v1071
      %1505 = vmatprep.subr.mxu0 0.0
      %1506 = vmatpush1.msra.mxu0 %v1072
      %1507 = vmatprep.subr.mxu0 0.0
      %1508 = vmatpush1.msra.mxu0 %v1073
      %1509 = vmatprep.subr.mxu0 0.0
      %1510 = vmatpush1.msra.mxu0 %v1074
      %1511 = vmatprep.subr.mxu0 0.0
      %1512 = vmatpush1.msra.mxu0 %v1075
      %1513 = vmatprep.subr.mxu0 0.0
      %1514 = vmatpush1.msra.mxu0 %v1076
      %1515 = vmatprep.subr.mxu0 0.0
      %1516 = vmatpush1.msra.mxu0 %v1077
      %1517 = vmatprep.subr.mxu0 0.0
      %1518 = vmatpush1.msra.mxu0 %v1078
      %1519 = vmatprep.subr.mxu0 0.0
      %1520 = vmatpush1.msra.mxu0 %v1079
      %1521 = vmatprep.subr.mxu0 0.0
      %1522 = vmatpush1.msra.mxu0 %v1080
      %1523 = vmatprep.subr.mxu0 0.0
      %1524 = vmatpush1.msra.mxu0 %v1081
      %1525 = vmatprep.subr.mxu0 0.0
      %1526 = vmatpush1.msra.mxu0 %v1082
      %1527 = vmatprep.subr.mxu0 0.0
      %1528 = vmatpush1.msra.mxu0 %v1083
      %1529 = vmatprep.subr.mxu0 0.0
      %1530 = vmatpush1.msra.mxu0 %v1084
      %1531 = vmatprep.subr.mxu0 0.0
      %1532 = vmatpush1.msra.mxu0 %v1085
      %1533 = vmatprep.subr.mxu0 0.0
      %1534 = vmatpush1.msra.mxu0 %v1086
      %1535 = vmatprep.subr.mxu0 0.0
      %1536 = vmatpush1.msra.mxu0 %v1087
      %1537 = vmatprep.subr.mxu0 0.0
      %1538 = vmatpush1.msra.mxu0 %v1088
      %1539 = vmatprep.subr.mxu0 0.0
      %1540 = vmatpush1.msra.mxu0 %v1089
      %1541 = vmatprep.subr.mxu0 0.0
      %1542 = vmatpush1.msra.mxu0 %v1090
      %1543 = vmatprep.subr.mxu0 0.0
      %1544 = vmatpush1.msra.mxu0 %v1091
      %1545 = vmatprep.subr.mxu0 0.0
      %1546 = vmatpush1.msra.mxu0 %v1092
      %1547 = vmatprep.mubr.f32.mxu0 %v1233
      %1548 = vmatmul.mubr.f32.gmra.mrb[0].mxu0 %v1231
      %v1549 = vpop.f32.mrb[0].mxu0
      %v1550 = vadd.f32 %v1480, %v1549
      %v1551 = vpop.f32.mrb[0].mxu0
      %1552 = vdwg.mxu0
      %1553 = vmatprep.subr.mxu0 0.0
      %1554 = vmatpush1.msra.mxu0 %v1093
      %1555 = vmatprep.subr.mxu0 0.0
      %1556 = vmatpush1.msra.mxu0 %v1094
      %1557 = vmatprep.subr.mxu0 0.0
      %1558 = vmatpush1.msra.mxu0 %v1095
      %1559 = vmatprep.subr.mxu0 0.0
      %1560 = vmatpush1.msra.mxu0 %v1096
      %1561 = vmatprep.subr.mxu0 0.0
      %1562 = vmatpush1.msra.mxu0 %v1097
      %1563 = vmatprep.subr.mxu0 0.0
      %1564 = vmatpush1.msra.mxu0 %v1098
      %1565 = vmatprep.subr.mxu0 0.0
      %1566 = vmatpush1.msra.mxu0 %v1099
      %1567 = vmatprep.subr.mxu0 0.0
      %1568 = vmatpush1.msra.mxu0 %v1100
      %1569 = vmatprep.subr.mxu0 0.0
      %1570 = vmatpush1.msra.mxu0 %v1101
      %1571 = vmatprep.subr.mxu0 0.0
      %1572 = vmatpush1.msra.mxu0 %v1102
      %1573 = vmatprep.subr.mxu0 0.0
      %1574 = vmatpush1.msra.mxu0 %v1103
      %1575 = vmatprep.subr.mxu0 0.0
      %1576 = vmatpush1.msra.mxu0 %v1104
      %1577 = vmatprep.subr.mxu0 0.0
      %1578 = vmatpush1.msra.mxu0 %v1105
      %1579 = vmatprep.subr.mxu0 0.0
      %1580 = vmatpush1.msra.mxu0 %v1106
      %1581 = vmatprep.subr.mxu0 0.0
      %1582 = vmatpush1.msra.mxu0 %v1107
      %1583 = vmatprep.subr.mxu0 0.0
      %1584 = vmatpush1.msra.mxu0 %v1108
      %1585 = vmatprep.subr.mxu0 0.0
      %1586 = vmatpush1.msra.mxu0 %v1109
      %1587 = vmatprep.subr.mxu0 0.0
      %1588 = vmatpush1.msra.mxu0 %v1110
      %1589 = vmatprep.subr.mxu0 0.0
      %1590 = vmatpush1.msra.mxu0 %v1111
      %1591 = vmatprep.subr.mxu0 0.0
      %1592 = vmatpush1.msra.mxu0 %v1112
      %1593 = vmatprep.subr.mxu0 0.0
      %1594 = vmatpush1.msra.mxu0 %v1113
      %1595 = vmatprep.subr.mxu0 0.0
      %1596 = vmatpush1.msra.mxu0 %v1114
      %1597 = vmatprep.subr.mxu0 0.0
      %1598 = vmatpush1.msra.mxu0 %v1115
      %1599 = vmatprep.subr.mxu0 0.0
      %1600 = vmatpush1.msra.mxu0 %v1116
      %1601 = vmatprep.subr.mxu0 0.0
      %1602 = vmatpush1.msra.mxu0 %v1117
      %1603 = vmatprep.subr.mxu0 0.0
      %1604 = vmatpush1.msra.mxu0 %v1118
      %1605 = vmatprep.subr.mxu0 0.0
      %1606 = vmatpush1.msra.mxu0 %v1119
      %1607 = vmatprep.subr.mxu0 0.0
      %1608 = vmatpush1.msra.mxu0 %v1120
      %1609 = vmatprep.subr.mxu0 0.0
      %1610 = vmatpush1.msra.mxu0 %v1121
      %1611 = vmatprep.subr.mxu0 0.0
      %1612 = vmatpush1.msra.mxu0 %v1122
      %1613 = vmatprep.subr.mxu0 0.0
      %1614 = vmatpush1.msra.mxu0 %v1123
      %1615 = vmatprep.subr.mxu0 0.0
      %1616 = vmatpush1.msra.mxu0 %v1124
      %1617 = vmatprep.mubr.f32.mxu0 %v1249
      %1618 = vmatmul.mubr.f32.gmra.mrb[0].mxu0 %v1241
      %v1619 = vpop.f32.mrb[0].mxu0
      %v1620 = vadd.f32 %v1550, %v1619
      %v1621 = vpop.f32.mrb[0].mxu0
      %1622 = vdwg.mxu0
      %1623 = vmatprep.subr.mxu0 0.0
      %1624 = vmatpush1.msra.mxu0 %v1125
      %1625 = vmatprep.subr.mxu0 0.0
      %1626 = vmatpush1.msra.mxu0 %v1126
      %1627 = vmatprep.subr.mxu0 0.0
      %1628 = vmatpush1.msra.mxu0 %v1127
      %1629 = vmatprep.subr.mxu0 0.0
      %1630 = vmatpush1.msra.mxu0 %v1128
      %1631 = vmatprep.subr.mxu0 0.0
      %1632 = vmatpush1.msra.mxu0 %v1129
      %1633 = vmatprep.subr.mxu0 0.0
      %1634 = vmatpush1.msra.mxu0 %v1130
      %1635 = vmatprep.subr.mxu0 0.0
      %1636 = vmatpush1.msra.mxu0 %v1131
      %1637 = vmatprep.subr.mxu0 0.0
      %1638 = vmatpush1.msra.mxu0 %v1132
      %1639 = vmatprep.subr.mxu0 0.0
      %1640 = vmatpush1.msra.mxu0 %v1133
      %1641 = vmatprep.subr.mxu0 0.0
      %1642 = vmatpush1.msra.mxu0 %v1134
      %1643 = vmatprep.subr.mxu0 0.0
      %1644 = vmatpush1.msra.mxu0 %v1135
      %1645 = vmatprep.subr.mxu0 0.0
      %1646 = vmatpush1.msra.mxu0 %v1136
      %1647 = vmatprep.subr.mxu0 0.0
      %1648 = vmatpush1.msra.mxu0 %v1137
      %1649 = vmatprep.subr.mxu0 0.0
      %1650 = vmatpush1.msra.mxu0 %v1138
      %1651 = vmatprep.subr.mxu0 0.0
      %1652 = vmatpush1.msra.mxu0 %v1139
      %1653 = vmatprep.subr.mxu0 0.0
      %1654 = vmatpush1.msra.mxu0 %v1140
      %1655 = vmatprep.subr.mxu0 0.0
      %1656 = vmatpush1.msra.mxu0 %v1141
      %1657 = vmatprep.subr.mxu0 0.0
      %1658 = vmatpush1.msra.mxu0 %v1142
      %1659 = vmatprep.subr.mxu0 0.0
      %1660 = vmatpush1.msra.mxu0 %v1143
      %1661 = vmatprep.subr.mxu0 0.0
      %1662 = vmatpush1.msra.mxu0 %v1144
      %1663 = vmatprep.subr.mxu0 0.0
      %1664 = vmatpush1.msra.mxu0 %v1145
      %1665 = vmatprep.subr.mxu0 0.0
      %1666 = vmatpush1.msra.mxu0 %v1146
      %1667 = vmatprep.subr.mxu0 0.0
      %1668 = vmatpush1.msra.mxu0 %v1147
      %1669 = vmatprep.subr.mxu0 0.0
      %1670 = vmatpush1.msra.mxu0 %v1148
      %1671 = vmatprep.subr.mxu0 0.0
      %1672 = vmatpush1.msra.mxu0 %v1149
      %1673 = vmatprep.subr.mxu0 0.0
      %1674 = vmatpush1.msra.mxu0 %v1150
      %1675 = vmatprep.subr.mxu0 0.0
      %1676 = vmatpush1.msra.mxu0 %v1151
      %1677 = vmatprep.subr.mxu0 0.0
      %1678 = vmatpush1.msra.mxu0 %v1152
      %1679 = vmatprep.subr.mxu0 0.0
      %1680 = vmatpush1.msra.mxu0 %v1153
      %1681 = vmatprep.subr.mxu0 0.0
      %1682 = vmatpush1.msra.mxu0 %v1154
      %1683 = vmatprep.subr.mxu0 0.0
      %1684 = vmatpush1.msra.mxu0 %v1155
      %1685 = vmatprep.subr.mxu0 0.0
      %1686 = vmatpush1.msra.mxu0 %v1156
      %1687 = vmatprep.mubr.f32.mxu0 %v1250
      %1688 = vmatmul.mubr.f32.gmra.mrb[0].mxu0 %v1248
      %v1689 = vpop.f32.mrb[0].mxu0
      %v1690 = vadd.f32 %v1620, %v1689
      %v1691 = vpop.f32.mrb[0].mxu0
      %1692 = vdwg.mxu0
      %1693 = vmatprep.subr.mxu0 0.0
      %1694 = vmatpush1.msra.mxu0 %v1157
      %1695 = vmatprep.subr.mxu0 0.0
      %1696 = vmatpush1.msra.mxu0 %v1158
      %1697 = vmatprep.subr.mxu0 0.0
      %1698 = vmatpush1.msra.mxu0 %v1159
      %1699 = vmatprep.subr.mxu0 0.0
      %1700 = vmatpush1.msra.mxu0 %v1160
      %1701 = vmatprep.subr.mxu0 0.0
      %1702 = vmatpush1.msra.mxu0 %v1161
      %1703 = vmatprep.subr.mxu0 0.0
      %1704 = vmatpush1.msra.mxu0 %v1162
      %1705 = vmatprep.subr.mxu0 0.0
      %1706 = vmatpush1.msra.mxu0 %v1163
      %1707 = vmatprep.subr.mxu0 0.0
      %1708 = vmatpush1.msra.mxu0 %v1164
      %1709 = vmatprep.subr.mxu0 0.0
      %1710 = vmatpush1.msra.mxu0 %v1165
      %1711 = vmatprep.subr.mxu0 0.0
      %1712 = vmatpush1.msra.mxu0 %v1166
      %1713 = vmatprep.subr.mxu0 0.0
      %1714 = vmatpush1.msra.mxu0 %v1167
      %1715 = vmatprep.subr.mxu0 0.0
      %1716 = vmatpush1.msra.mxu0 %v1168
      %1717 = vmatprep.subr.mxu0 0.0
      %1718 = vmatpush1.msra.mxu0 %v1169
      %1719 = vmatprep.subr.mxu0 0.0
      %1720 = vmatpush1.msra.mxu0 %v1170
      %1721 = vmatprep.subr.mxu0 0.0
      %1722 = vmatpush1.msra.mxu0 %v1171
      %1723 = vmatprep.subr.mxu0 0.0
      %1724 = vmatpush1.msra.mxu0 %v1172
      %1725 = vmatprep.subr.mxu0 0.0
      %1726 = vmatpush1.msra.mxu0 %v1173
      %1727 = vmatprep.subr.mxu0 0.0
      %1728 = vmatpush1.msra.mxu0 %v1174
      %1729 = vmatprep.subr.mxu0 0.0
      %1730 = vmatpush1.msra.mxu0 %v1175
      %1731 = vmatprep.subr.mxu0 0.0
      %1732 = vmatpush1.msra.mxu0 %v1176
      %1733 = vmatprep.subr.mxu0 0.0
      %1734 = vmatpush1.msra.mxu0 %v1177
      %1735 = vmatprep.subr.mxu0 0.0
      %1736 = vmatpush1.msra.mxu0 %v1178
      %1737 = vmatprep.subr.mxu0 0.0
      %1738 = vmatpush1.msra.mxu0 %v1179
      %1739 = vmatprep.subr.mxu0 0.0
      %1740 = vmatpush1.msra.mxu0 %v1180
      %1741 = vmatprep.subr.mxu0 0.0
      %1742 = vmatpush1.msra.mxu0 %v1181
      %1743 = vmatprep.subr.mxu0 0.0
      %1744 = vmatpush1.msra.mxu0 %v1182
      %1745 = vmatprep.subr.mxu0 0.0
      %1746 = vmatpush1.msra.mxu0 %v1183
      %1747 = vmatprep.subr.mxu0 0.0
      %1748 = vmatpush1.msra.mxu0 %v1184
      %1749 = vmatprep.subr.mxu0 0.0
      %1750 = vmatpush1.msra.mxu0 %v1185
      %1751 = vmatprep.subr.mxu0 0.0
      %1752 = vmatpush1.msra.mxu0 %v1186
      %1753 = vmatprep.subr.mxu0 0.0
      %1754 = vmatpush1.msra.mxu0 %v1187
      %1755 = vmatprep.subr.mxu0 0.0
      %1756 = vmatpush1.msra.mxu0 %v1188
      %1757 = vmatprep.mubr.f32.mxu0 %v1258
      %1758 = vmatmul.mubr.f32.gmra.mrb[0].mxu0 %v1257
      %v1759 = vpop.f32.mrb[0].mxu0
      %v1760 = vadd.f32 %v1690, %v1759
      %v1761 = vpop.f32.mrb[0].mxu0
      %1762 = vdwg.mxu0
      %v1763 = vld [vmem:[%s3] sm:$0x1]
      %v1765 = vlaneseq
      %v1766 = vshrl.u32 %v1765, 7
      %v1767 = vsub.s32 0, %v1766
      %v1768 = vrot.slane %v1763, %v1767
      %v1770 = vmul.f32 %v1760, %v1768
      %vm1771 = vcmask 1041408
      %v1772 = vsel %vm1771, %v1770, 0.0
      %1773 = vadd.xlane.f32.xlu0 %v1772
      %v1774 = vpop.xlane.xlu0 %1773
      %v1775 = vld [vmem:[#allocation3] sm:$0x1]
      %v1777 = vlaneseq
      %v1778 = vshrl.u32 %v1777, 7
      %v1779 = vsub.s32 0, %v1778
      %v1780 = vrot.slane %v1775, %v1779
      %v1782 = vadd.f32 %v1774, %v1780
      %vm1783 = vcmask 1024
      %1784 = vst.msk [vmem:[%s5] sm:$0x3] %vm1783, %v1782
    $region37: #{tpu_custom_call.1} parent=1 // pred_fallthru
      _
    // Predicated region
    $region38: #{tpu_custom_call.1} parent=1 // pred_check
      _
    $region39: #{tpu_custom_call.1} parent=1 // pred_check_branch
      %1786 = sbr.rel (0) target = $region41
    $region40: #{tpu_custom_call.1} parent=1 // pred_region
      _
    $region41: #{tpu_custom_call.1} parent=1 // pred_fallthru
      _
    // Predicated region
    $region42: #{tpu_custom_call.1} parent=1 // pred_check
      _
    $region43: #{tpu_custom_call.1} parent=1 // pred_check_branch
      %1788 = sbr.rel (0) target = $region45
    $region44: #{tpu_custom_call.1} parent=1 // pred_region
      _
    $region45: #{tpu_custom_call.1} parent=1 // pred_fallthru
      _
    %1789 = vsyncpa [#allocation5], 1
    %1790 = vsyncpa [#allocation7], 1

</llo_original>
